<compile_context>
chip_gen: v5e
topology: v5e:2x2
jax: 0.10.0
libtpu: 0.0.40
codegen_flags: <defaults>
</compile_context>

<pallas_src>
import math

import jax
import jax.numpy as jnp
from jax.experimental import pallas as pl
from jax.experimental.pallas import tpu as pltpu

DEGREES = list(range(10))
HIDDEN = 32
N_OUT = len(DEGREES)
# Zonal spherical harmonic normalization constants (folded into w3/b3 on host).
COEFFS = [math.sqrt((2 * l + 1) / (4.0 * math.pi)) for l in DEGREES]
# Bonnet recurrence, division-free form: P_{l+1} = a_l * x * P_l - b_l * P_{l-1}
A_COEF = [(2.0 * l + 1.0) / (l + 1.0) for l in range(N_OUT)]
B_COEF = [float(l) / (l + 1.0) for l in range(N_OUT)]


def harmonics_kernel(rt_ref, w1_ref, b1_ref, w2_ref, b2_ref, w3_ref, b3_ref, o_ref):
    r = rt_ref[0:1, :]      # (1, TN)   batch on lanes
    theta = rt_ref[1:2, :]  # (1, TN)

    # ---- FCNN(1 -> 32 -> 32 -> 10), tanh activations, features on sublanes ----
    # First layer has K=1: broadcasted outer product (H,1)*(1,TN) -> (H,TN), VPU.
    h1 = jnp.tanh(w1_ref[...] * r + b1_ref[...])                          # (H, TN) f32
    # MXU matmuls with bf16 operands, f32 accumulation (single-pass on the MXU).
    z2 = jnp.dot(w2_ref[...], h1.astype(jnp.bfloat16),
                 preferred_element_type=jnp.float32) + b2_ref[...]        # (H, TN) f32
    h2 = jnp.tanh(z2)
    # w3 / b3 already carry the zonal-harmonic coefficients (folded on host).
    R = jnp.dot(w3_ref[...], h2.astype(jnp.bfloat16),
                preferred_element_type=jnp.float32) + b3_ref[...]         # (L, TN) f32

    # ---- Legendre recurrence + fused accumulate:  out = sum_l R[l,:] * P_l(cos th) ----
    # (Kept as sublane-row slices + VPU FMAs: even at 1/8 vreg occupancy this chain is
    #  tiny next to the MXU/EUP work, so no scratch round-trip is taken.)
    x = jnp.cos(theta)                      # (1, TN)
    p_prev = jnp.ones_like(x)               # P_0
    p_cur = x                               # P_1
    acc = R[0:1, :] + R[1:2, :] * x         # R already includes c_l; P_0 == 1
    for l in range(1, N_OUT - 1):
        p_next = A_COEF[l] * x * p_cur - B_COEF[l] * p_prev
        acc = acc + R[l + 1:l + 2, :] * p_next
        p_prev, p_cur = p_cur, p_next

    o_ref[...] = acc                        # (1, TN) lane-dense store


def init_params(key):
    """Deterministic, in-script parameter init for FCNN(1, 32, 32, 10)."""
    k1, k2, k3, k4, k5, k6 = jax.random.split(key, 6)
    w1 = jax.random.uniform(k1, (1, HIDDEN), jnp.float32, -1.0, 1.0)
    b1 = jax.random.uniform(k2, (1, HIDDEN), jnp.float32, -1.0, 1.0)
    s2 = 1.0 / math.sqrt(HIDDEN)
    w2 = jax.random.uniform(k3, (HIDDEN, HIDDEN), jnp.float32, -s2, s2)
    b2 = jax.random.uniform(k4, (1, HIDDEN), jnp.float32, -s2, s2)
    w3 = jax.random.uniform(k5, (HIDDEN, N_OUT), jnp.float32, -s2, s2)
    b3 = jax.random.uniform(k6, (1, N_OUT), jnp.float32, -s2, s2)
    return w1, b1, w2, b2, w3, b3


def _round_up(x, m):
    return -(-x // m) * m


def _choose_tile_n(N, max_tile=8192):
    """Largest lane-tile (multiple of 128, <= max_tile) that still leaves the
    'parallel' grid axis with >= 2 steps, so both v7x TensorCores are fed and
    padding stays minimal."""
    grid = max(2, -(-N // max_tile))          # at least 2 grid steps
    return _round_up(-(-N // grid), 128)      # <= max_tile since max_tile % 128 == 0


def harmonics_nn(r, theta, phi, params, *, tile_n=None, max_tile_n=8192):
    """Pallas forward. `phi` accepted for API parity but unused (zonal harmonics)."""
    del phi
    N = r.shape[0]
    w1, b1, w2, b2, w3, b3 = params

    # ---- Host-side parameter prep (layout transpose + coefficient folding + bf16) ----
    coeffs = jnp.asarray(COEFFS, jnp.float32)[:, None]            # (L, 1)
    w1_t = w1.T.astype(jnp.float32)                               # (H, 1)
    b1_t = b1.reshape(HIDDEN, 1).astype(jnp.float32)              # (H, 1)
    w2_t = w2.T.astype(jnp.bfloat16)                              # (H, H)  bf16 MXU operand
    b2_t = b2.reshape(HIDDEN, 1).astype(jnp.float32)              # (H, 1)
    w3_t = (w3.T * coeffs).astype(jnp.bfloat16)                   # (L, H)  c_l folded, bf16
    b3_t = (b3.reshape(N_OUT, 1) * coeffs).astype(jnp.float32)    # (L, 1)

    # ---- Lane-dense batch layout: r/theta packed into one (2, Np) streamed input ----
    if tile_n is None:
        tile_n = _choose_tile_n(N, max_tile_n)
    Np = _round_up(N, tile_n)
    n_pad = Np - N
    rt = jnp.concatenate(
        [r.reshape(1, N).astype(jnp.float32),
         theta.reshape(1, N).astype(jnp.float32)], axis=0)
    rt = jnp.pad(rt, ((0, 0), (0, n_pad)))                        # (2, Np)

    rt_spec = pl.BlockSpec((2, tile_n), lambda i: (0, i))
    out_spec = pl.BlockSpec((1, tile_n), lambda i: (0, i))
    full = lambda shape: pl.BlockSpec(shape, lambda i: (0, 0))    # weights stay resident

    out_row = pl.pallas_call(
        harmonics_kernel,
        out_shape=jax.ShapeDtypeStruct((1, Np), jnp.float32),
        grid_spec=pltpu.PrefetchScalarGridSpec(
            num_scalar_prefetch=0,
            grid=(Np // tile_n,),
            in_specs=[
                rt_spec,                       # [r; theta]  (2, Np)
                full((HIDDEN, 1)),             # w1ᵀ
                full((HIDDEN, 1)),             # b1
                full((HIDDEN, HIDDEN)),        # w2ᵀ (bf16)
                full((HIDDEN, 1)),             # b2
                full((N_OUT, HIDDEN)),         # w3ᵀ (coeff-scaled, bf16)
                full((N_OUT, 1)),              # b3  (coeff-scaled)
            ],
            out_specs=out_spec,
        ),
        compiler_params=pltpu.CompilerParams(dimension_semantics=("parallel",)),
    )(rt, w1_t, b1_t, w2_t, b2_t, w3_t, b3_t)

    return out_row[0, :N].reshape(N, 1)


def harmonics_nn_ref(r, theta, phi, params):
    """Pure-JAX f32 reference (mirrors the PyTorch module exactly)."""
    del phi
    w1, b1, w2, b2, w3, b3 = params
    h1 = jnp.tanh(r @ w1 + b1)
    h2 = jnp.tanh(h1 @ w2 + b2)
    R = h2 @ w3 + b3
    x = jnp.cos(theta)
    P = [jnp.ones_like(x), x]
    for l in range(1, max(DEGREES)):
        P.append(((2.0 * l + 1.0) * x * P[l] - float(l) * P[l - 1]) / float(l + 1))
    Y = jnp.concatenate([COEFFS[i] * P[l] for i, l in enumerate(DEGREES)], axis=1)
    return jnp.sum(R * Y, axis=1, keepdims=True)


if __name__ == "__main__":
    key = jax.random.PRNGKey(0)
    kp, kr, kt, kf = jax.random.split(key, 4)

    params = init_params(kp)

    # N not a multiple of 128 exercises the padding path; auto tile selection
    # gives tile_n=2048, grid=(2,) -> both v7x TensorCores get a tile.
    N = 4000
    r = jax.random.uniform(kr, (N, 1), jnp.float32, 0.1, 1.0)
    theta = jax.random.uniform(kt, (N, 1), jnp.float32, 0.0, math.pi)
    phi = jax.random.uniform(kf, (N, 1), jnp.float32, 0.0, 2.0 * math.pi)

    out = harmonics_nn(r, theta, phi, params)
    out = jax.block_until_ready(out)

    ref = harmonics_nn_ref(r, theta, phi, params)
    assert out.shape == (N, 1)
    # Tolerance deliberately relaxed vs the f32 reference because the two MXU
    # matmuls use bf16 operands (f32 accumulation); observed error is O(1e-3).
    assert jnp.allclose(out, ref, atol=2e-2, rtol=2e-2), "mismatch vs pure-JAX reference"

    print("KERNEL_OK")
</pallas_src>

<mosaic_0001>
module attributes {stable_mosaic.version = 11 : i64} {
  func.func @harmonics_kernel(%arg0: i32, %arg1: memref<2x2048xf32, #tpu.memory_space<vmem>>, %arg2: memref<32x1xf32, #tpu.memory_space<vmem>>, %arg3: memref<32x1xf32, #tpu.memory_space<vmem>>, %arg4: memref<32x32xbf16, #tpu.memory_space<vmem>>, %arg5: memref<32x1xf32, #tpu.memory_space<vmem>>, %arg6: memref<10x32xbf16, #tpu.memory_space<vmem>>, %arg7: memref<10x1xf32, #tpu.memory_space<vmem>>, %arg8: memref<1x2048xf32, #tpu.memory_space<vmem>>) attributes {dimension_semantics = [#tpu.dimension_semantics<parallel>], iteration_bounds = array<i64: 2>, scalar_prefetch = 0 : i64, scratch_operands = 0 : i64, tpu.core_type = #tpu.core_type<tc>, window_params = [{transform_indices = @transform_0, window_bounds = array<i64: 2, 2048>}, {pipeline_mode = #tpu.pipeline_mode<synchronous>, transform_indices = @transform_1, window_bounds = array<i64: 32, 1>}, {pipeline_mode = #tpu.pipeline_mode<synchronous>, transform_indices = @transform_2, window_bounds = array<i64: 32, 1>}, {pipeline_mode = #tpu.pipeline_mode<synchronous>, transform_indices = @transform_3, window_bounds = array<i64: 32, 32>}, {pipeline_mode = #tpu.pipeline_mode<synchronous>, transform_indices = @transform_4, window_bounds = array<i64: 32, 1>}, {pipeline_mode = #tpu.pipeline_mode<synchronous>, transform_indices = @transform_5, window_bounds = array<i64: 10, 32>}, {pipeline_mode = #tpu.pipeline_mode<synchronous>, transform_indices = @transform_6, window_bounds = array<i64: 10, 1>}, {transform_indices = @transform_7, window_bounds = array<i64: 1, 2048>}]} {
    %c0 = arith.constant 0 : index
    %c0_0 = arith.constant 0 : index
    %0 = vector.load %arg1[%c0, %c0_0] : memref<2x2048xf32, #tpu.memory_space<vmem>>, vector<1x2048xf32>
    %c1 = arith.constant 1 : index
    %c0_1 = arith.constant 0 : index
    %1 = vector.load %arg1[%c1, %c0_1] : memref<2x2048xf32, #tpu.memory_space<vmem>>, vector<1x2048xf32>
    %c0_2 = arith.constant 0 : index
    %c0_3 = arith.constant 0 : index
    %2 = vector.load %arg2[%c0_2, %c0_3] : memref<32x1xf32, #tpu.memory_space<vmem>>, vector<32x1xf32>
    %3 = vector.broadcast %2 : vector<32x1xf32> to vector<32x2048xf32>
    %4 = vector.broadcast %0 : vector<1x2048xf32> to vector<32x2048xf32>
    %5 = arith.mulf %3, %4 : vector<32x2048xf32>
    %c0_4 = arith.constant 0 : index
    %c0_5 = arith.constant 0 : index
    %6 = vector.load %arg3[%c0_4, %c0_5] : memref<32x1xf32, #tpu.memory_space<vmem>>, vector<32x1xf32>
    %7 = vector.broadcast %6 : vector<32x1xf32> to vector<32x2048xf32>
    %8 = arith.addf %5, %7 : vector<32x2048xf32>
    %9 = math.tanh %8 : vector<32x2048xf32>
    %c0_6 = arith.constant 0 : index
    %c0_7 = arith.constant 0 : index
    %10 = vector.load %arg4[%c0_6, %c0_7] : memref<32x32xbf16, #tpu.memory_space<vmem>>, vector<32x32xbf16>
    %11 = arith.truncf %9 : vector<32x2048xf32> to vector<32x2048xbf16>
    %cst = arith.constant dense<0.000000e+00> : vector<32x2048xf32>
    %12 = tpu.matmul %10, %11, %cst {dimension_numbers = #tpu.dot_dimension_numbers<[1], [0], [0], [1], [0, 0, 1, 1], [], []>} : vector<32x32xbf16>, vector<32x2048xbf16>, vector<32x2048xf32> -> vector<32x2048xf32>
    %c0_8 = arith.constant 0 : index
    %c0_9 = arith.constant 0 : index
    %13 = vector.load %arg5[%c0_8, %c0_9] : memref<32x1xf32, #tpu.memory_space<vmem>>, vector<32x1xf32>
    %14 = vector.broadcast %13 : vector<32x1xf32> to vector<32x2048xf32>
    %15 = arith.addf %12, %14 : vector<32x2048xf32>
    %16 = math.tanh %15 : vector<32x2048xf32>
    %c0_10 = arith.constant 0 : index
    %c0_11 = arith.constant 0 : index
    %17 = vector.load %arg6[%c0_10, %c0_11] : memref<10x32xbf16, #tpu.memory_space<vmem>>, vector<10x32xbf16>
    %18 = arith.truncf %16 : vector<32x2048xf32> to vector<32x2048xbf16>
    %cst_12 = arith.constant dense<0.000000e+00> : vector<10x2048xf32>
    %19 = tpu.matmul %17, %18, %cst_12 {dimension_numbers = #tpu.dot_dimension_numbers<[1], [0], [0], [1], [0, 0, 1, 1], [], []>} : vector<10x32xbf16>, vector<32x2048xbf16>, vector<10x2048xf32> -> vector<10x2048xf32>
    %c0_13 = arith.constant 0 : index
    %c0_14 = arith.constant 0 : index
    %20 = vector.load %arg7[%c0_13, %c0_14] : memref<10x1xf32, #tpu.memory_space<vmem>>, vector<10x1xf32>
    %21 = vector.broadcast %20 : vector<10x1xf32> to vector<10x2048xf32>
    %22 = arith.addf %19, %21 : vector<10x2048xf32>
    %23 = math.cos %1 : vector<1x2048xf32>
    %cst_15 = arith.constant 1.000000e+00 : f32
    %24 = vector.broadcast %cst_15 : f32 to vector<1x2048xf32>
    %25 = vector.extract_strided_slice %22 {offsets = [0, 0], sizes = [1, 2048], strides = [1, 1]} : vector<10x2048xf32> to vector<1x2048xf32>
    %26 = vector.extract_strided_slice %22 {offsets = [1, 0], sizes = [1, 2048], strides = [1, 1]} : vector<10x2048xf32> to vector<1x2048xf32>
    %27 = arith.mulf %26, %23 : vector<1x2048xf32>
    %28 = arith.addf %25, %27 : vector<1x2048xf32>
    %cst_16 = arith.constant 1.500000e+00 : f32
    %29 = vector.broadcast %cst_16 : f32 to vector<1x2048xf32>
    %30 = arith.mulf %29, %23 : vector<1x2048xf32>
    %31 = arith.mulf %30, %23 : vector<1x2048xf32>
    %cst_17 = arith.constant 5.000000e-01 : f32
    %32 = vector.broadcast %cst_17 : f32 to vector<1x2048xf32>
    %33 = arith.mulf %32, %24 : vector<1x2048xf32>
    %34 = arith.subf %31, %33 : vector<1x2048xf32>
    %35 = vector.extract_strided_slice %22 {offsets = [2, 0], sizes = [1, 2048], strides = [1, 1]} : vector<10x2048xf32> to vector<1x2048xf32>
    %36 = arith.mulf %35, %34 : vector<1x2048xf32>
    %37 = arith.addf %28, %36 : vector<1x2048xf32>
    %cst_18 = arith.constant 1.66666663 : f32
    %38 = vector.broadcast %cst_18 : f32 to vector<1x2048xf32>
    %39 = arith.mulf %38, %23 : vector<1x2048xf32>
    %40 = arith.mulf %39, %34 : vector<1x2048xf32>
    %cst_19 = arith.constant 0.666666686 : f32
    %41 = vector.broadcast %cst_19 : f32 to vector<1x2048xf32>
    %42 = arith.mulf %41, %23 : vector<1x2048xf32>
    %43 = arith.subf %40, %42 : vector<1x2048xf32>
    %44 = vector.extract_strided_slice %22 {offsets = [3, 0], sizes = [1, 2048], strides = [1, 1]} : vector<10x2048xf32> to vector<1x2048xf32>
    %45 = arith.mulf %44, %43 : vector<1x2048xf32>
    %46 = arith.addf %37, %45 : vector<1x2048xf32>
    %cst_20 = arith.constant 1.750000e+00 : f32
    %47 = vector.broadcast %cst_20 : f32 to vector<1x2048xf32>
    %48 = arith.mulf %47, %23 : vector<1x2048xf32>
    %49 = arith.mulf %48, %43 : vector<1x2048xf32>
    %cst_21 = arith.constant 7.500000e-01 : f32
    %50 = vector.broadcast %cst_21 : f32 to vector<1x2048xf32>
    %51 = arith.mulf %50, %34 : vector<1x2048xf32>
    %52 = arith.subf %49, %51 : vector<1x2048xf32>
    %53 = vector.extract_strided_slice %22 {offsets = [4, 0], sizes = [1, 2048], strides = [1, 1]} : vector<10x2048xf32> to vector<1x2048xf32>
    %54 = arith.mulf %53, %52 : vector<1x2048xf32>
    %55 = arith.addf %46, %54 : vector<1x2048xf32>
    %cst_22 = arith.constant 1.800000e+00 : f32
    %56 = vector.broadcast %cst_22 : f32 to vector<1x2048xf32>
    %57 = arith.mulf %56, %23 : vector<1x2048xf32>
    %58 = arith.mulf %57, %52 : vector<1x2048xf32>
    %cst_23 = arith.constant 8.000000e-01 : f32
    %59 = vector.broadcast %cst_23 : f32 to vector<1x2048xf32>
    %60 = arith.mulf %59, %43 : vector<1x2048xf32>
    %61 = arith.subf %58, %60 : vector<1x2048xf32>
    %62 = vector.extract_strided_slice %22 {offsets = [5, 0], sizes = [1, 2048], strides = [1, 1]} : vector<10x2048xf32> to vector<1x2048xf32>
    %63 = arith.mulf %62, %61 : vector<1x2048xf32>
    %64 = arith.addf %55, %63 : vector<1x2048xf32>
    %cst_24 = arith.constant 1.83333337 : f32
    %65 = vector.broadcast %cst_24 : f32 to vector<1x2048xf32>
    %66 = arith.mulf %65, %23 : vector<1x2048xf32>
    %67 = arith.mulf %66, %61 : vector<1x2048xf32>
    %cst_25 = arith.constant 0.833333313 : f32
    %68 = vector.broadcast %cst_25 : f32 to vector<1x2048xf32>
    %69 = arith.mulf %68, %52 : vector<1x2048xf32>
    %70 = arith.subf %67, %69 : vector<1x2048xf32>
    %71 = vector.extract_strided_slice %22 {offsets = [6, 0], sizes = [1, 2048], strides = [1, 1]} : vector<10x2048xf32> to vector<1x2048xf32>
    %72 = arith.mulf %71, %70 : vector<1x2048xf32>
    %73 = arith.addf %64, %72 : vector<1x2048xf32>
    %cst_26 = arith.constant 1.85714281 : f32
    %74 = vector.broadcast %cst_26 : f32 to vector<1x2048xf32>
    %75 = arith.mulf %74, %23 : vector<1x2048xf32>
    %76 = arith.mulf %75, %70 : vector<1x2048xf32>
    %cst_27 = arith.constant 0.857142865 : f32
    %77 = vector.broadcast %cst_27 : f32 to vector<1x2048xf32>
    %78 = arith.mulf %77, %61 : vector<1x2048xf32>
    %79 = arith.subf %76, %78 : vector<1x2048xf32>
    %80 = vector.extract_strided_slice %22 {offsets = [7, 0], sizes = [1, 2048], strides = [1, 1]} : vector<10x2048xf32> to vector<1x2048xf32>
    %81 = arith.mulf %80, %79 : vector<1x2048xf32>
    %82 = arith.addf %73, %81 : vector<1x2048xf32>
    %cst_28 = arith.constant 1.875000e+00 : f32
    %83 = vector.broadcast %cst_28 : f32 to vector<1x2048xf32>
    %84 = arith.mulf %83, %23 : vector<1x2048xf32>
    %85 = arith.mulf %84, %79 : vector<1x2048xf32>
    %cst_29 = arith.constant 8.750000e-01 : f32
    %86 = vector.broadcast %cst_29 : f32 to vector<1x2048xf32>
    %87 = arith.mulf %86, %70 : vector<1x2048xf32>
    %88 = arith.subf %85, %87 : vector<1x2048xf32>
    %89 = vector.extract_strided_slice %22 {offsets = [8, 0], sizes = [1, 2048], strides = [1, 1]} : vector<10x2048xf32> to vector<1x2048xf32>
    %90 = arith.mulf %89, %88 : vector<1x2048xf32>
    %91 = arith.addf %82, %90 : vector<1x2048xf32>
    %cst_30 = arith.constant 1.88888884 : f32
    %92 = vector.broadcast %cst_30 : f32 to vector<1x2048xf32>
    %93 = arith.mulf %92, %23 : vector<1x2048xf32>
    %94 = arith.mulf %93, %88 : vector<1x2048xf32>
    %cst_31 = arith.constant 0.888888895 : f32
    %95 = vector.broadcast %cst_31 : f32 to vector<1x2048xf32>
    %96 = arith.mulf %95, %79 : vector<1x2048xf32>
    %97 = arith.subf %94, %96 : vector<1x2048xf32>
    %98 = vector.extract_strided_slice %22 {offsets = [9, 0], sizes = [1, 2048], strides = [1, 1]} : vector<10x2048xf32> to vector<1x2048xf32>
    %99 = arith.mulf %98, %97 : vector<1x2048xf32>
    %100 = arith.addf %91, %99 : vector<1x2048xf32>
    %c0_32 = arith.constant 0 : index
    %c0_33 = arith.constant 0 : index
    %101 = vector.load %arg8[%c0_32, %c0_33] : memref<1x2048xf32, #tpu.memory_space<vmem>>, vector<1x2048xf32>
    tpu.vector_store %arg8[%c0_32, %c0_33], %100 {strides = array<i32>} : memref<1x2048xf32, #tpu.memory_space<vmem>>, vector<1x2048xf32>,
    return
  }
  func.func @transform_0(%arg0: i32) -> (i32, i32) {
    %c0_i32 = arith.constant 0 : i32
    %c0_i32_0 = arith.constant 0 : i32
    return %c0_i32, %arg0 : i32, i32
  }
  func.func @transform_1(%arg0: i32) -> (i32, i32) {
    %c0_i32 = arith.constant 0 : i32
    %c0_i32_0 = arith.constant 0 : i32
    %c0_i32_1 = arith.constant 0 : i32
    return %c0_i32, %c0_i32_0 : i32, i32
  }
  func.func @transform_2(%arg0: i32) -> (i32, i32) {
    %c0_i32 = arith.constant 0 : i32
    %c0_i32_0 = arith.constant 0 : i32
    %c0_i32_1 = arith.constant 0 : i32
    return %c0_i32, %c0_i32_0 : i32, i32
  }
  func.func @transform_3(%arg0: i32) -> (i32, i32) {
    %c0_i32 = arith.constant 0 : i32
    %c0_i32_0 = arith.constant 0 : i32
    %c0_i32_1 = arith.constant 0 : i32
    return %c0_i32, %c0_i32_0 : i32, i32
  }
  func.func @transform_4(%arg0: i32) -> (i32, i32) {
    %c0_i32 = arith.constant 0 : i32
    %c0_i32_0 = arith.constant 0 : i32
    %c0_i32_1 = arith.constant 0 : i32
    return %c0_i32, %c0_i32_0 : i32, i32
  }
  func.func @transform_5(%arg0: i32) -> (i32, i32) {
    %c0_i32 = arith.constant 0 : i32
    %c0_i32_0 = arith.constant 0 : i32
    %c0_i32_1 = arith.constant 0 : i32
    return %c0_i32, %c0_i32_0 : i32, i32
  }
  func.func @transform_6(%arg0: i32) -> (i32, i32) {
    %c0_i32 = arith.constant 0 : i32
    %c0_i32_0 = arith.constant 0 : i32
    %c0_i32_1 = arith.constant 0 : i32
    return %c0_i32, %c0_i32_0 : i32, i32
  }
  func.func @transform_7(%arg0: i32) -> (i32, i32) {
    %c0_i32 = arith.constant 0 : i32
    %c0_i32_0 = arith.constant 0 : i32
    return %c0_i32, %arg0 : i32, i32
  }
}

</mosaic_0001>

<llo_original>
// kernel: tpu_custom_call.1
$region0: #{tpu_custom_call.1}
  #allocation0 [shape = 'u32[]', space=smem, size = 0x4, offset = 0x4, fixed_abs, tag = 'smem constant byte address 0x4 - core index']
  #allocation1 [shape = 'u32[72,128]{1,0:T(1,128)}', space=vmem, size = 0x9000, scoped, tag = 'internal scratch']
  %s0 = inlined_call_operand.vmem [shape: f32[2,4096], index: 0, kind: input, shape index: {}]
  %s1 = inlined_call_operand.vmem [shape: f32[32,1], index: 1, kind: input, shape index: {}]
  %s2 = inlined_call_operand.vmem [shape: f32[32,1], index: 2, kind: input, shape index: {}]
  %s3 = inlined_call_operand.vmem [shape: bf16[32,32], index: 3, kind: input, shape index: {}]
  %s4 = inlined_call_operand.vmem [shape: f32[32,1], index: 4, kind: input, shape index: {}]
  %s5 = inlined_call_operand.vmem [shape: bf16[10,32], index: 5, kind: input, shape index: {}]
  %s6 = inlined_call_operand.vmem [shape: f32[10,1], index: 6, kind: input, shape index: {}]
  %s7 = inlined_call_operand.hbm [shape: f32[1,4096], index: 7, kind: output, shape index: {}]
  %s8 = sld [smem:[#allocation0]]
  $region61: #{tpu_custom_call.1} parent=0
    _
  %s10 = ssub.s32 1, %s8
  %s11 = scalar_select 0, %s10, %s8
  $region1: #{tpu_custom_call.1} parent=0
    #allocation2 [shape = 'u8[16384]{0}', space=vmem, size = 0x4000, scoped, tag = 'output window, operand 0']
    #allocation3 [shape = 's32[2]{0}', space=sflag, size = 0x8, scoped, tag = 'scoped memory for tpu_custom_call.1']
    %12 = vsyncpa [#allocation3], 0
    %s13 = scalar_lea.sflag [#allocation3], 1
    %14 = vsyncpa %s13, 0
    loop: start=0, step=1, limit=4
    $region2: #{tpu_custom_call.1} parent=1 // loop_pre_header
      _
    $region3: #{tpu_custom_call.1} parent=1 // loop_header
      %s16 = sphi 0, %s20
      %p17 = scmp.ge.s32.totalorder %s16, 4
      %s26 = sphi 0, %s28
      %s29 = sphi 0, %s26
      %s30 = sphi 0, %s29
      %s46 = sphi 0, %s30
      %s50 = sphi 0, %s50
      %s52 = sphi 0, %s50
      %s53 = sphi 0, %s52
      %s67 = sphi 0, %s53
      %s71 = sphi 0, %s71
      %s73 = sphi 0, %s71
      %s74 = sphi 0, %s73
      %s88 = sphi 0, %s74
      %s92 = sphi 0, %s92
      %s94 = sphi 0, %s92
      %s95 = sphi 0, %s94
      %s109 = sphi 0, %s95
      %s113 = sphi 0, %s113
      %s115 = sphi 0, %s113
      %s116 = sphi 0, %s115
      %s130 = sphi 0, %s116
      %s134 = sphi 0, %s134
      %s136 = sphi 0, %s134
      %s137 = sphi 0, %s136
      %s151 = sphi 0, %s137
      %s155 = sphi 0, %s155
      %s157 = sphi 0, %s155
      %s158 = sphi 0, %s157
      %s172 = sphi 0, %s158
      %s178 = sphi 0, %s180
      %s181 = sphi 0, %s178
      %s182 = sphi 0, %s181
      %s198 = sphi 0, %s182
    $region4: #{tpu_custom_call.1} parent=1 // loop_header_branch
      %19 = sbr.rel (%p17) target = $region8
    $region5: #{tpu_custom_call.1} parent=1 // loop_body
      %s21 = ssub.s32 %s16, 1
      %s22 = ssub.s32 %s16, 2
      %s23 = sadd.s32 %s16, 1
      %s24 = ssub.s32 %s16, %s23
      %p25 = scmp.eq.s32.totalorder %s24, 0
      %s27 = sadd.s32 %s26, 1
      %s28 = scalar_select %p25, %s26, %s27
      %p31 = pneg %p25
      %p32 = scmp.eq.s32.totalorder %s16, 1
      %p33 = por %p31, %p32
      %p34 = scmp.ne.s32.totalorder %s26, %s29
      %p35 = scmp.eq.s32.totalorder %s16, 0
      %p36 = por %p34, %p35
      %p37 = scmp.ne.s32.totalorder %s26, %s29
      %p38 = scmp.eq.s32.totalorder %s21, 1
      %p39 = por %p37, %p38
      %p40 = scmp.ne.s32.totalorder %s29, %s30
      %p41 = scmp.eq.s32.totalorder %s21, 0
      %p42 = por %p40, %p41
      %p43 = scmp.ne.s32.totalorder %s29, %s30
      %p44 = scmp.eq.s32.totalorder %s22, 1
      %p45 = por %p43, %p44
      %p47 = scmp.ne.s32.totalorder %s30, %s46
      %p48 = scmp.eq.s32.totalorder %s22, 0
      %p49 = por %p47, %p48
      %s51 = sadd.s32 %s50, 1
      %p54 = scmp.eq.s32.totalorder %s16, 1
      %p55 = scmp.ne.s32.totalorder %s50, %s52
      %p56 = scmp.eq.s32.totalorder %s16, 0
      %p57 = por %p55, %p56
      %p58 = scmp.ne.s32.totalorder %s50, %s52
      %p59 = scmp.eq.s32.totalorder %s21, 1
      %p60 = por %p58, %p59
      %p61 = scmp.ne.s32.totalorder %s52, %s53
      %p62 = scmp.eq.s32.totalorder %s21, 0
      %p63 = por %p61, %p62
      %p64 = scmp.ne.s32.totalorder %s52, %s53
      %p65 = scmp.eq.s32.totalorder %s22, 1
      %p66 = por %p64, %p65
      %p68 = scmp.ne.s32.totalorder %s53, %s67
      %p69 = scmp.eq.s32.totalorder %s22, 0
      %p70 = por %p68, %p69
      %s72 = sadd.s32 %s71, 1
      %p75 = scmp.eq.s32.totalorder %s16, 1
      %p76 = scmp.ne.s32.totalorder %s71, %s73
      %p77 = scmp.eq.s32.totalorder %s16, 0
      %p78 = por %p76, %p77
      %p79 = scmp.ne.s32.totalorder %s71, %s73
      %p80 = scmp.eq.s32.totalorder %s21, 1
      %p81 = por %p79, %p80
      %p82 = scmp.ne.s32.totalorder %s73, %s74
      %p83 = scmp.eq.s32.totalorder %s21, 0
      %p84 = por %p82, %p83
      %p85 = scmp.ne.s32.totalorder %s73, %s74
      %p86 = scmp.eq.s32.totalorder %s22, 1
      %p87 = por %p85, %p86
      %p89 = scmp.ne.s32.totalorder %s74, %s88
      %p90 = scmp.eq.s32.totalorder %s22, 0
      %p91 = por %p89, %p90
      %s93 = sadd.s32 %s92, 1
      %p96 = scmp.eq.s32.totalorder %s16, 1
      %p97 = scmp.ne.s32.totalorder %s92, %s94
      %p98 = scmp.eq.s32.totalorder %s16, 0
      %p99 = por %p97, %p98
      %p100 = scmp.ne.s32.totalorder %s92, %s94
      %p101 = scmp.eq.s32.totalorder %s21, 1
      %p102 = por %p100, %p101
      %p103 = scmp.ne.s32.totalorder %s94, %s95
      %p104 = scmp.eq.s32.totalorder %s21, 0
      %p105 = por %p103, %p104
      %p106 = scmp.ne.s32.totalorder %s94, %s95
      %p107 = scmp.eq.s32.totalorder %s22, 1
      %p108 = por %p106, %p107
      %p110 = scmp.ne.s32.totalorder %s95, %s109
      %p111 = scmp.eq.s32.totalorder %s22, 0
      %p112 = por %p110, %p111
      %s114 = sadd.s32 %s113, 1
      %p117 = scmp.eq.s32.totalorder %s16, 1
      %p118 = scmp.ne.s32.totalorder %s113, %s115
      %p119 = scmp.eq.s32.totalorder %s16, 0
      %p120 = por %p118, %p119
      %p121 = scmp.ne.s32.totalorder %s113, %s115
      %p122 = scmp.eq.s32.totalorder %s21, 1
      %p123 = por %p121, %p122
      %p124 = scmp.ne.s32.totalorder %s115, %s116
      %p125 = scmp.eq.s32.totalorder %s21, 0
      %p126 = por %p124, %p125
      %p127 = scmp.ne.s32.totalorder %s115, %s116
      %p128 = scmp.eq.s32.totalorder %s22, 1
      %p129 = por %p127, %p128
      %p131 = scmp.ne.s32.totalorder %s116, %s130
      %p132 = scmp.eq.s32.totalorder %s22, 0
      %p133 = por %p131, %p132
      %s135 = sadd.s32 %s134, 1
      %p138 = scmp.eq.s32.totalorder %s16, 1
      %p139 = scmp.ne.s32.totalorder %s134, %s136
      %p140 = scmp.eq.s32.totalorder %s16, 0
      %p141 = por %p139, %p140
      %p142 = scmp.ne.s32.totalorder %s134, %s136
      %p143 = scmp.eq.s32.totalorder %s21, 1
      %p144 = por %p142, %p143
      %p145 = scmp.ne.s32.totalorder %s136, %s137
      %p146 = scmp.eq.s32.totalorder %s21, 0
      %p147 = por %p145, %p146
      %p148 = scmp.ne.s32.totalorder %s136, %s137
      %p149 = scmp.eq.s32.totalorder %s22, 1
      %p150 = por %p148, %p149
      %p152 = scmp.ne.s32.totalorder %s137, %s151
      %p153 = scmp.eq.s32.totalorder %s22, 0
      %p154 = por %p152, %p153
      %s156 = sadd.s32 %s155, 1
      %p159 = scmp.eq.s32.totalorder %s16, 1
      %p160 = scmp.ne.s32.totalorder %s155, %s157
      %p161 = scmp.eq.s32.totalorder %s16, 0
      %p162 = por %p160, %p161
      %p163 = scmp.ne.s32.totalorder %s155, %s157
      %p164 = scmp.eq.s32.totalorder %s21, 1
      %p165 = por %p163, %p164
      %p166 = scmp.ne.s32.totalorder %s157, %s158
      %p167 = scmp.eq.s32.totalorder %s21, 0
      %p168 = por %p166, %p167
      %p169 = scmp.ne.s32.totalorder %s157, %s158
      %p170 = scmp.eq.s32.totalorder %s22, 1
      %p171 = por %p169, %p170
      %p173 = scmp.ne.s32.totalorder %s158, %s172
      %p174 = scmp.eq.s32.totalorder %s22, 0
      %p175 = por %p173, %p174
      %s176 = ssub.s32 %s16, %s23
      %p177 = scmp.eq.s32.totalorder %s176, 0
      %s179 = sadd.s32 %s178, 1
      %s180 = scalar_select %p177, %s178, %s179
      %p183 = pneg %p177
      %p184 = scmp.eq.s32.totalorder %s16, 1
      %p185 = por %p183, %p184
      %p186 = scmp.ne.s32.totalorder %s178, %s181
      %p187 = scmp.eq.s32.totalorder %s16, 0
      %p188 = por %p186, %p187
      %p189 = scmp.ne.s32.totalorder %s178, %s181
      %p190 = scmp.eq.s32.totalorder %s21, 1
      %p191 = por %p189, %p190
      %p192 = scmp.ne.s32.totalorder %s181, %s182
      %p193 = scmp.eq.s32.totalorder %s21, 0
      %p194 = por %p192, %p193
      %p195 = scmp.ne.s32.totalorder %s181, %s182
      %p196 = scmp.eq.s32.totalorder %s22, 1
      %p197 = por %p195, %p196
      %p199 = scmp.ne.s32.totalorder %s182, %s198
      %p200 = scmp.eq.s32.totalorder %s22, 0
      %p201 = por %p199, %p200
      %p202 = scmp.le.s32.totalorder 1, %s16
      %p203 = scmp.lt.s32.totalorder %s16, 3
      %p204 = pnand %p202, %p203
      %p205 = pneg %p204
      // Predicated region
      $region9: #{tpu_custom_call.1} parent=5 // pred_check
        _
      $region10: #{tpu_custom_call.1} parent=5 // pred_check_branch
        %207 = sbr.rel (%p204) target = $region12
      $region11: #{tpu_custom_call.1} parent=5 // pred_region
        %s208 = ssub.s32 %s16, 1
        // Predicated region
        $region13: #{tpu_custom_call.1} parent=11 // pred_check
          %p209 = pneg %p63
        $region14: #{tpu_custom_call.1} parent=11 // pred_check_branch
          %211 = sbr.rel (%p209) target = $region16
        $region15: #{tpu_custom_call.1} parent=11 // pred_region
          _
        $region16: #{tpu_custom_call.1} parent=11 // pred_fallthru
          _
        // Predicated region
        $region17: #{tpu_custom_call.1} parent=11 // pred_check
          %p212 = pneg %p84
        $region18: #{tpu_custom_call.1} parent=11 // pred_check_branch
          %214 = sbr.rel (%p212) target = $region20
        $region19: #{tpu_custom_call.1} parent=11 // pred_region
          _
        $region20: #{tpu_custom_call.1} parent=11 // pred_fallthru
          _
        // Predicated region
        $region21: #{tpu_custom_call.1} parent=11 // pred_check
          %p215 = pneg %p105
        $region22: #{tpu_custom_call.1} parent=11 // pred_check_branch
          %217 = sbr.rel (%p215) target = $region24
        $region23: #{tpu_custom_call.1} parent=11 // pred_region
          _
        $region24: #{tpu_custom_call.1} parent=11 // pred_fallthru
          _
        // Predicated region
        $region25: #{tpu_custom_call.1} parent=11 // pred_check
          %p218 = pneg %p126
        $region26: #{tpu_custom_call.1} parent=11 // pred_check_branch
          %220 = sbr.rel (%p218) target = $region28
        $region27: #{tpu_custom_call.1} parent=11 // pred_region
          _
        $region28: #{tpu_custom_call.1} parent=11 // pred_fallthru
          _
        // Predicated region
        $region29: #{tpu_custom_call.1} parent=11 // pred_check
          %p221 = pneg %p147
        $region30: #{tpu_custom_call.1} parent=11 // pred_check_branch
          %223 = sbr.rel (%p221) target = $region32
        $region31: #{tpu_custom_call.1} parent=11 // pred_region
          _
        $region32: #{tpu_custom_call.1} parent=11 // pred_fallthru
          _
        // Predicated region
        $region33: #{tpu_custom_call.1} parent=11 // pred_check
          %p224 = pneg %p168
        $region34: #{tpu_custom_call.1} parent=11 // pred_check_branch
          %226 = sbr.rel (%p224) target = $region36
        $region35: #{tpu_custom_call.1} parent=11 // pred_region
          _
        $region36: #{tpu_custom_call.1} parent=11 // pred_fallthru
          _
      $region12: #{tpu_custom_call.1} parent=5 // pred_fallthru
        _
      %p227 = scmp.lt.s32.totalorder %s16, 2
      // Predicated region
      $region37: #{tpu_custom_call.1} parent=5 // pred_check
        %p228 = pneg %p227
      $region38: #{tpu_custom_call.1} parent=5 // pred_check_branch
        %230 = sbr.rel (%p228) target = $region40
      $region39: #{tpu_custom_call.1} parent=5 // pred_region
        // Predicated region
        $region41: #{tpu_custom_call.1} parent=39 // pred_check
          %p231 = pneg %p36
        $region42: #{tpu_custom_call.1} parent=39 // pred_check_branch
          %233 = sbr.rel (%p231) target = $region44
        $region43: #{tpu_custom_call.1} parent=39 // pred_region
          %s234 = smul.u32 16, %s16
          %p235 = scmp.lt.s32.totalorder %s234, 31
          %s236 = scalar_select %p235, %s234, 31
          %s237 = smul.addr %s236, 2
          %s238 = scalar_lea.vmem %s0, %s237
          %s239 = smul.u32 16, %s16
        $region44: #{tpu_custom_call.1} parent=39 // pred_fallthru
          _
      $region40: #{tpu_custom_call.1} parent=5 // pred_fallthru
        _
      %p240 = scmp.le.s32.totalorder 1, %s16
      %p241 = scmp.lt.s32.totalorder %s16, 3
      %p242 = pnand %p240, %p241
      %p243 = pneg %p242
      // Predicated region
      $region45: #{tpu_custom_call.1} parent=5 // pred_check
        _
      $region46: #{tpu_custom_call.1} parent=5 // pred_check_branch
        %245 = sbr.rel (%p242) target = $region48
      $region47: #{tpu_custom_call.1} parent=5 // pred_region
        %s246 = ssub.s32 %s16, 1
        %s247 = smul.u32 16, %s21
        %p248 = scmp.lt.s32.totalorder %s247, 31
        %s249 = scalar_select %p248, %s247, 31
        %s250 = smul.addr %s249, 2
        %s251 = scalar_lea.vmem %s0, %s250
        %p252 = pneg %p42
        %p253 = pneg %p39
        %p254 = pneg %p63
        %p255 = pneg %p60
        %p256 = pneg %p84
        %p257 = pneg %p81
        %p258 = pneg %p105
        %p259 = pneg %p102
        %p260 = pneg %p126
        %p261 = pneg %p123
        %p262 = pneg %p147
        %p263 = pneg %p144
        %p264 = pneg %p168
        %p265 = pneg %p165
        %p266 = pneg %p194
        %p267 = pneg %p191
        %s268 = sand.u32 %s181, 1
        %s269 = scalar_lea.sflag [#allocation3], %s268
        %s270 = sand.u32 %s181, 1
        %s271 = smul.addr %s270, 16
        %s272 = scalar_lea.vmem [#allocation2], %s271
        %s273 = smul.u32 16, %s21
        %p274 = scmp.lt.s32.totalorder %s273, 31
        %s275 = scalar_select %p274, %s273, 31
        %s276 = smul.addr %s275, 2
        %s277 = scalar_lea.vmem %s0, %s276
        %s278 = smul.u32 16, %s21
        %s279 = smul.u32 16, %s21
        %v281 = vld [vmem:[%s277] ss:$2 sm:$0xff]
        %s282 = scalar_lea.vmem %s277, 16
        %v283 = vld [vmem:[%s282] ss:$2 sm:$0xff]
        %s284 = scalar_lea.vmem %s277, 1
        %v285 = vld [vmem:[%s284] ss:$2 sm:$0xff]
        %s286 = scalar_lea.vmem %s277, 17
        %v287 = vld [vmem:[%s286] ss:$2 sm:$0xff]
        %v288 = vld [vmem:[%s1] sm:$0xff]
        %v289 = vld [vmem:[%s1 + $0x8] sm:$0xff]
        %v290 = vld [vmem:[%s1 + $0x10] sm:$0xff]
        %v291 = vld [vmem:[%s1 + $0x18] sm:$0xff]
        %293 = vset.pattern.permute.xlu0 0
        %294 = vperm.xlu0 %293, %v288
        %v295 = vpop.permute.xlu0 %294
        %298 = vset.pattern.permute.xlu0 0
        %299 = vperm.xlu0 %298, %v289
        %v300 = vpop.permute.xlu0 %299
        %303 = vset.pattern.permute.xlu0 0
        %304 = vperm.xlu0 %303, %v290
        %v305 = vpop.permute.xlu0 %304
        %308 = vset.pattern.permute.xlu0 0
        %309 = vperm.xlu0 %308, %v291
        %v310 = vpop.permute.xlu0 %309
        %v314 = vperm.slane %v281, 0
        %v315 = vperm.slane %v281, 1
        %v316 = vperm.slane %v281, 2
        %v317 = vperm.slane %v281, 3
        %v318 = vperm.slane %v281, 4
        %v319 = vperm.slane %v281, 5
        %v320 = vperm.slane %v281, 6
        %v321 = vperm.slane %v281, 7
        %v322 = vperm.slane %v283, 0
        %v323 = vperm.slane %v283, 1
        %v324 = vperm.slane %v283, 2
        %v325 = vperm.slane %v283, 3
        %v326 = vperm.slane %v283, 4
        %v327 = vperm.slane %v283, 5
        %v328 = vperm.slane %v283, 6
        %v329 = vperm.slane %v283, 7
        %v346 = vmul.f32 %v295, %v314
        %v347 = vmul.f32 %v295, %v315
        %v348 = vmul.f32 %v295, %v316
        %v349 = vmul.f32 %v295, %v317
        %v350 = vmul.f32 %v295, %v318
        %v351 = vmul.f32 %v295, %v319
        %v352 = vmul.f32 %v295, %v320
        %v353 = vmul.f32 %v295, %v321
        %v354 = vmul.f32 %v295, %v322
        %v355 = vmul.f32 %v295, %v323
        %v356 = vmul.f32 %v295, %v324
        %v357 = vmul.f32 %v295, %v325
        %v358 = vmul.f32 %v295, %v326
        %v359 = vmul.f32 %v295, %v327
        %v360 = vmul.f32 %v295, %v328
        %v361 = vmul.f32 %v295, %v329
        %v362 = vmul.f32 %v300, %v314
        %v363 = vmul.f32 %v300, %v315
        %v364 = vmul.f32 %v300, %v316
        %v365 = vmul.f32 %v300, %v317
        %v366 = vmul.f32 %v300, %v318
        %v367 = vmul.f32 %v300, %v319
        %v368 = vmul.f32 %v300, %v320
        %v369 = vmul.f32 %v300, %v321
        %v370 = vmul.f32 %v300, %v322
        %v371 = vmul.f32 %v300, %v323
        %v372 = vmul.f32 %v300, %v324
        %v373 = vmul.f32 %v300, %v325
        %v374 = vmul.f32 %v300, %v326
        %v375 = vmul.f32 %v300, %v327
        %v376 = vmul.f32 %v300, %v328
        %v377 = vmul.f32 %v300, %v329
        %v378 = vmul.f32 %v305, %v314
        %v379 = vmul.f32 %v305, %v315
        %v380 = vmul.f32 %v305, %v316
        %v381 = vmul.f32 %v305, %v317
        %v382 = vmul.f32 %v305, %v318
        %v383 = vmul.f32 %v305, %v319
        %v384 = vmul.f32 %v305, %v320
        %v385 = vmul.f32 %v305, %v321
        %v386 = vmul.f32 %v305, %v322
        %v387 = vmul.f32 %v305, %v323
        %v388 = vmul.f32 %v305, %v324
        %v389 = vmul.f32 %v305, %v325
        %v390 = vmul.f32 %v305, %v326
        %v391 = vmul.f32 %v305, %v327
        %v392 = vmul.f32 %v305, %v328
        %v393 = vmul.f32 %v305, %v329
        %v394 = vmul.f32 %v310, %v314
        %v395 = vmul.f32 %v310, %v315
        %v396 = vmul.f32 %v310, %v316
        %v397 = vmul.f32 %v310, %v317
        %v398 = vmul.f32 %v310, %v318
        %v399 = vmul.f32 %v310, %v319
        %v400 = vmul.f32 %v310, %v320
        %v401 = vmul.f32 %v310, %v321
        %v402 = vmul.f32 %v310, %v322
        %v403 = vmul.f32 %v310, %v323
        %v404 = vmul.f32 %v310, %v324
        %v405 = vmul.f32 %v310, %v325
        %v406 = vmul.f32 %v310, %v326
        %v407 = vmul.f32 %v310, %v327
        %v408 = vmul.f32 %v310, %v328
        %v409 = vmul.f32 %v310, %v329
        %v410 = vld [vmem:[%s2] sm:$0xff]
        %v411 = vld [vmem:[%s2 + $0x8] sm:$0xff]
        %v412 = vld [vmem:[%s2 + $0x10] sm:$0xff]
        %v413 = vld [vmem:[%s2 + $0x18] sm:$0xff]
        %415 = vset.pattern.permute.xlu0 0
        %416 = vperm.xlu0 %415, %v410
        %v417 = vpop.permute.xlu0 %416
        %420 = vset.pattern.permute.xlu0 0
        %421 = vperm.xlu0 %420, %v411
        %v422 = vpop.permute.xlu0 %421
        %425 = vset.pattern.permute.xlu0 0
        %426 = vperm.xlu0 %425, %v412
        %v427 = vpop.permute.xlu0 %426
        %430 = vset.pattern.permute.xlu0 0
        %431 = vperm.xlu0 %430, %v413
        %v432 = vpop.permute.xlu0 %431
        %v434 = vadd.f32 %v346, %v417
        %v435 = vadd.f32 %v347, %v417
        %v436 = vadd.f32 %v348, %v417
        %v437 = vadd.f32 %v349, %v417
        %v438 = vadd.f32 %v350, %v417
        %v439 = vadd.f32 %v351, %v417
        %v440 = vadd.f32 %v352, %v417
        %v441 = vadd.f32 %v353, %v417
        %v442 = vadd.f32 %v354, %v417
        %v443 = vadd.f32 %v355, %v417
        %v444 = vadd.f32 %v356, %v417
        %v445 = vadd.f32 %v357, %v417
        %v446 = vadd.f32 %v358, %v417
        %v447 = vadd.f32 %v359, %v417
        %v448 = vadd.f32 %v360, %v417
        %v449 = vadd.f32 %v361, %v417
        %v450 = vadd.f32 %v362, %v422
        %v451 = vadd.f32 %v363, %v422
        %v452 = vadd.f32 %v364, %v422
        %v453 = vadd.f32 %v365, %v422
        %v454 = vadd.f32 %v366, %v422
        %v455 = vadd.f32 %v367, %v422
        %v456 = vadd.f32 %v368, %v422
        %v457 = vadd.f32 %v369, %v422
        %v458 = vadd.f32 %v370, %v422
        %v459 = vadd.f32 %v371, %v422
        %v460 = vadd.f32 %v372, %v422
        %v461 = vadd.f32 %v373, %v422
        %v462 = vadd.f32 %v374, %v422
        %v463 = vadd.f32 %v375, %v422
        %v464 = vadd.f32 %v376, %v422
        %v465 = vadd.f32 %v377, %v422
        %v466 = vadd.f32 %v378, %v427
        %v467 = vadd.f32 %v379, %v427
        %v468 = vadd.f32 %v380, %v427
        %v469 = vadd.f32 %v381, %v427
        %v470 = vadd.f32 %v382, %v427
        %v471 = vadd.f32 %v383, %v427
        %v472 = vadd.f32 %v384, %v427
        %v473 = vadd.f32 %v385, %v427
        %v474 = vadd.f32 %v386, %v427
        %v475 = vadd.f32 %v387, %v427
        %v476 = vadd.f32 %v388, %v427
        %v477 = vadd.f32 %v389, %v427
        %v478 = vadd.f32 %v390, %v427
        %v479 = vadd.f32 %v391, %v427
        %v480 = vadd.f32 %v392, %v427
        %v481 = vadd.f32 %v393, %v427
        %v482 = vadd.f32 %v394, %v432
        %v483 = vadd.f32 %v395, %v432
        %v484 = vadd.f32 %v396, %v432
        %v485 = vadd.f32 %v397, %v432
        %v486 = vadd.f32 %v398, %v432
        %v487 = vadd.f32 %v399, %v432
        %v488 = vadd.f32 %v400, %v432
        %v489 = vadd.f32 %v401, %v432
        %v490 = vadd.f32 %v402, %v432
        %v491 = vadd.f32 %v403, %v432
        %v492 = vadd.f32 %v404, %v432
        %v493 = vadd.f32 %v405, %v432
        %v494 = vadd.f32 %v406, %v432
        %v495 = vadd.f32 %v407, %v432
        %v496 = vadd.f32 %v408, %v432
        %v497 = vadd.f32 %v409, %v432
        %v498 = vtanh.pop %v434
        %v499 = vtanh.pop %v435
        %v500 = vtanh.pop %v436
        %v501 = vtanh.pop %v437
        %v502 = vtanh.pop %v438
        %v503 = vtanh.pop %v439
        %v504 = vtanh.pop %v440
        %v505 = vtanh.pop %v441
        %v506 = vtanh.pop %v442
        %v507 = vtanh.pop %v443
        %v508 = vtanh.pop %v444
        %v509 = vtanh.pop %v445
        %v510 = vtanh.pop %v446
        %v511 = vtanh.pop %v447
        %v512 = vtanh.pop %v448
        %v513 = vtanh.pop %v449
        %v514 = vtanh.pop %v450
        %v515 = vtanh.pop %v451
        %v516 = vtanh.pop %v452
        %v517 = vtanh.pop %v453
        %v518 = vtanh.pop %v454
        %v519 = vtanh.pop %v455
        %v520 = vtanh.pop %v456
        %v521 = vtanh.pop %v457
        %v522 = vtanh.pop %v458
        %v523 = vtanh.pop %v459
        %v524 = vtanh.pop %v460
        %v525 = vtanh.pop %v461
        %v526 = vtanh.pop %v462
        %v527 = vtanh.pop %v463
        %v528 = vtanh.pop %v464
        %v529 = vtanh.pop %v465
        %v530 = vtanh.pop %v466
        %v531 = vtanh.pop %v467
        %v532 = vtanh.pop %v468
        %v533 = vtanh.pop %v469
        %v534 = vtanh.pop %v470
        %v535 = vtanh.pop %v471
        %v536 = vtanh.pop %v472
        %v537 = vtanh.pop %v473
        %v538 = vtanh.pop %v474
        %v539 = vtanh.pop %v475
        %v540 = vtanh.pop %v476
        %v541 = vtanh.pop %v477
        %v542 = vtanh.pop %v478
        %v543 = vtanh.pop %v479
        %v544 = vtanh.pop %v480
        %v545 = vtanh.pop %v481
        %v546 = vtanh.pop %v482
        %v547 = vtanh.pop %v483
        %v548 = vtanh.pop %v484
        %v549 = vtanh.pop %v485
        %v550 = vtanh.pop %v486
        %v551 = vtanh.pop %v487
        %v552 = vtanh.pop %v488
        %v553 = vtanh.pop %v489
        %v554 = vtanh.pop %v490
        %v555 = vtanh.pop %v491
        %v556 = vtanh.pop %v492
        %v557 = vtanh.pop %v493
        %v558 = vtanh.pop %v494
        %v559 = vtanh.pop %v495
        %v560 = vtanh.pop %v496
        %v561 = vtanh.pop %v497
        %v562 = vld [vmem:[%s3] sm:$0xf]
        %v563 = vld [vmem:[%s3 + $0x4] sm:$0xf]
        %v564 = vld [vmem:[%s3 + $0x8] sm:$0xf]
        %v565 = vld [vmem:[%s3 + $0xc] sm:$0xf]
        %v566 = vpack.c.bf16 %v514, %v498
        %v567 = vpack.c.bf16 %v515, %v499
        %v568 = vpack.c.bf16 %v516, %v500
        %v569 = vpack.c.bf16 %v517, %v501
        %v570 = vpack.c.bf16 %v518, %v502
        %v571 = vpack.c.bf16 %v519, %v503
        %v572 = vpack.c.bf16 %v520, %v504
        %v573 = vpack.c.bf16 %v521, %v505
        %v574 = vpack.c.bf16 %v522, %v506
        %v575 = vpack.c.bf16 %v523, %v507
        %v576 = vpack.c.bf16 %v524, %v508
        %v577 = vpack.c.bf16 %v525, %v509
        %v578 = vpack.c.bf16 %v526, %v510
        %v579 = vpack.c.bf16 %v527, %v511
        %v580 = vpack.c.bf16 %v528, %v512
        %v581 = vpack.c.bf16 %v529, %v513
        %v582 = vpack.c.bf16 %v546, %v530
        %v583 = vpack.c.bf16 %v547, %v531
        %v584 = vpack.c.bf16 %v548, %v532
        %v585 = vpack.c.bf16 %v549, %v533
        %v586 = vpack.c.bf16 %v550, %v534
        %v587 = vpack.c.bf16 %v551, %v535
        %v588 = vpack.c.bf16 %v552, %v536
        %v589 = vpack.c.bf16 %v553, %v537
        %v590 = vpack.c.bf16 %v554, %v538
        %v591 = vpack.c.bf16 %v555, %v539
        %v592 = vpack.c.bf16 %v556, %v540
        %v593 = vpack.c.bf16 %v557, %v541
        %v594 = vpack.c.bf16 %v558, %v542
        %v595 = vpack.c.bf16 %v559, %v543
        %v596 = vpack.c.bf16 %v560, %v544
        %v597 = vpack.c.bf16 %v561, %v545
        %v598 = vld [vmem:[%s4] sm:$0xff]
        %v599 = vld [vmem:[%s4 + $0x8] sm:$0xff]
        %v600 = vld [vmem:[%s4 + $0x10] sm:$0xff]
        %v601 = vld [vmem:[%s4 + $0x18] sm:$0xff]
        %603 = vset.pattern.permute.xlu0 0
        %604 = vperm.xlu0 %603, %v598
        %v605 = vpop.permute.xlu0 %604
        %608 = vset.pattern.permute.xlu0 0
        %609 = vperm.xlu0 %608, %v599
        %v610 = vpop.permute.xlu0 %609
        %613 = vset.pattern.permute.xlu0 0
        %614 = vperm.xlu0 %613, %v600
        %v615 = vpop.permute.xlu0 %614
        %618 = vset.pattern.permute.xlu0 0
        %619 = vperm.xlu0 %618, %v601
        %v620 = vpop.permute.xlu0 %619
        %v626 = vunpack.c.l.b16 %v562
        %v627 = vunpack.c.l.b16 %v563
        %v628 = vunpack.c.l.b16 %v564
        %v629 = vunpack.c.l.b16 %v565
        %v630 = vpack.c.b16 %v627, %v626
        %v631 = vpack.c.b16 %v629, %v628
        %vm632 = vcmask 261120
        %v634 = vsel %vm632, %v630, 0
        %v637 = vsel %vm632, %v631, 0
        %639 = vmatpush.bf16.msra.mxu0 0
        %640 = vmatpush.bf16.msra.mxu0 0
        %641 = vmatpush.bf16.msra.mxu0 0
        %642 = vmatpush.bf16.msra.mxu0 0
        %643 = vmatpush.bf16.msra.mxu0 0
        %644 = vmatpush.bf16.msra.mxu0 0
        %645 = vmatpush.bf16.msra.mxu0 %v582
        %646 = vmatpush.bf16.msra.mxu0 %v566
        %647 = vmatmul.bf16.gmra.mxu0 %v634
        %v648 = vpop.f32.mrf.mxu0
        %v649 = vadd.f32 %v605, %v648
        %v650 = vpop.f32.mrf.mxu0
        %v651 = vadd.f32 %v610, %v650
        %652 = vmatmul.bf16.gmra.mxu0 %v637
        %v653 = vpop.f32.mrf.mxu0
        %v654 = vadd.f32 %v615, %v653
        %v655 = vpop.f32.mrf.mxu0
        %v656 = vadd.f32 %v620, %v655
        %657 = vdwg.mxu0
        %658 = vmatpush.bf16.msra.mxu0 0
        %659 = vmatpush.bf16.msra.mxu0 0
        %660 = vmatpush.bf16.msra.mxu0 0
        %661 = vmatpush.bf16.msra.mxu0 0
        %662 = vmatpush.bf16.msra.mxu0 0
        %663 = vmatpush.bf16.msra.mxu0 0
        %664 = vmatpush.bf16.msra.mxu0 %v583
        %665 = vmatpush.bf16.msra.mxu0 %v567
        %666 = vmatmul.bf16.gmra.mxu0 %v634
        %v667 = vpop.f32.mrf.mxu0
        %v668 = vadd.f32 %v605, %v667
        %v669 = vpop.f32.mrf.mxu0
        %v670 = vadd.f32 %v610, %v669
        %671 = vmatmul.bf16.gmra.mxu0 %v637
        %v672 = vpop.f32.mrf.mxu0
        %v673 = vadd.f32 %v615, %v672
        %v674 = vpop.f32.mrf.mxu0
        %v675 = vadd.f32 %v620, %v674
        %676 = vdwg.mxu0
        %677 = vmatpush.bf16.msra.mxu0 0
        %678 = vmatpush.bf16.msra.mxu0 0
        %679 = vmatpush.bf16.msra.mxu0 0
        %680 = vmatpush.bf16.msra.mxu0 0
        %681 = vmatpush.bf16.msra.mxu0 0
        %682 = vmatpush.bf16.msra.mxu0 0
        %683 = vmatpush.bf16.msra.mxu0 %v584
        %684 = vmatpush.bf16.msra.mxu0 %v568
        %685 = vmatmul.bf16.gmra.mxu0 %v634
        %v686 = vpop.f32.mrf.mxu0
        %v687 = vadd.f32 %v605, %v686
        %v688 = vpop.f32.mrf.mxu0
        %v689 = vadd.f32 %v610, %v688
        %690 = vmatmul.bf16.gmra.mxu0 %v637
        %v691 = vpop.f32.mrf.mxu0
        %v692 = vadd.f32 %v615, %v691
        %v693 = vpop.f32.mrf.mxu0
        %v694 = vadd.f32 %v620, %v693
        %695 = vdwg.mxu0
        %696 = vmatpush.bf16.msra.mxu0 0
        %697 = vmatpush.bf16.msra.mxu0 0
        %698 = vmatpush.bf16.msra.mxu0 0
        %699 = vmatpush.bf16.msra.mxu0 0
        %700 = vmatpush.bf16.msra.mxu0 0
        %701 = vmatpush.bf16.msra.mxu0 0
        %702 = vmatpush.bf16.msra.mxu0 %v585
        %703 = vmatpush.bf16.msra.mxu0 %v569
        %704 = vmatmul.bf16.gmra.mxu0 %v634
        %v705 = vpop.f32.mrf.mxu0
        %v706 = vadd.f32 %v605, %v705
        %v707 = vpop.f32.mrf.mxu0
        %v708 = vadd.f32 %v610, %v707
        %709 = vmatmul.bf16.gmra.mxu0 %v637
        %v710 = vpop.f32.mrf.mxu0
        %v711 = vadd.f32 %v615, %v710
        %v712 = vpop.f32.mrf.mxu0
        %v713 = vadd.f32 %v620, %v712
        %714 = vdwg.mxu0
        %715 = vmatpush.bf16.msra.mxu0 0
        %716 = vmatpush.bf16.msra.mxu0 0
        %717 = vmatpush.bf16.msra.mxu0 0
        %718 = vmatpush.bf16.msra.mxu0 0
        %719 = vmatpush.bf16.msra.mxu0 0
        %720 = vmatpush.bf16.msra.mxu0 0
        %721 = vmatpush.bf16.msra.mxu0 %v586
        %722 = vmatpush.bf16.msra.mxu0 %v570
        %723 = vmatmul.bf16.gmra.mxu0 %v634
        %v724 = vpop.f32.mrf.mxu0
        %v725 = vadd.f32 %v605, %v724
        %v726 = vpop.f32.mrf.mxu0
        %v727 = vadd.f32 %v610, %v726
        %728 = vmatmul.bf16.gmra.mxu0 %v637
        %v729 = vpop.f32.mrf.mxu0
        %v730 = vadd.f32 %v615, %v729
        %v731 = vpop.f32.mrf.mxu0
        %v732 = vadd.f32 %v620, %v731
        %733 = vdwg.mxu0
        %734 = vmatpush.bf16.msra.mxu0 0
        %735 = vmatpush.bf16.msra.mxu0 0
        %736 = vmatpush.bf16.msra.mxu0 0
        %737 = vmatpush.bf16.msra.mxu0 0
        %738 = vmatpush.bf16.msra.mxu0 0
        %739 = vmatpush.bf16.msra.mxu0 0
        %740 = vmatpush.bf16.msra.mxu0 %v587
        %741 = vmatpush.bf16.msra.mxu0 %v571
        %742 = vmatmul.bf16.gmra.mxu0 %v634
        %v743 = vpop.f32.mrf.mxu0
        %v744 = vadd.f32 %v605, %v743
        %v745 = vpop.f32.mrf.mxu0
        %v746 = vadd.f32 %v610, %v745
        %747 = vmatmul.bf16.gmra.mxu0 %v637
        %v748 = vpop.f32.mrf.mxu0
        %v749 = vadd.f32 %v615, %v748
        %v750 = vpop.f32.mrf.mxu0
        %v751 = vadd.f32 %v620, %v750
        %752 = vdwg.mxu0
        %753 = vmatpush.bf16.msra.mxu0 0
        %754 = vmatpush.bf16.msra.mxu0 0
        %755 = vmatpush.bf16.msra.mxu0 0
        %756 = vmatpush.bf16.msra.mxu0 0
        %757 = vmatpush.bf16.msra.mxu0 0
        %758 = vmatpush.bf16.msra.mxu0 0
        %759 = vmatpush.bf16.msra.mxu0 %v588
        %760 = vmatpush.bf16.msra.mxu0 %v572
        %761 = vmatmul.bf16.gmra.mxu0 %v634
        %v762 = vpop.f32.mrf.mxu0
        %v763 = vadd.f32 %v605, %v762
        %v764 = vpop.f32.mrf.mxu0
        %v765 = vadd.f32 %v610, %v764
        %766 = vmatmul.bf16.gmra.mxu0 %v637
        %v767 = vpop.f32.mrf.mxu0
        %v768 = vadd.f32 %v615, %v767
        %v769 = vpop.f32.mrf.mxu0
        %v770 = vadd.f32 %v620, %v769
        %771 = vdwg.mxu0
        %772 = vmatpush.bf16.msra.mxu0 0
        %773 = vmatpush.bf16.msra.mxu0 0
        %774 = vmatpush.bf16.msra.mxu0 0
        %775 = vmatpush.bf16.msra.mxu0 0
        %776 = vmatpush.bf16.msra.mxu0 0
        %777 = vmatpush.bf16.msra.mxu0 0
        %778 = vmatpush.bf16.msra.mxu0 %v589
        %779 = vmatpush.bf16.msra.mxu0 %v573
        %780 = vmatmul.bf16.gmra.mxu0 %v634
        %v781 = vpop.f32.mrf.mxu0
        %v782 = vadd.f32 %v605, %v781
        %v783 = vpop.f32.mrf.mxu0
        %v784 = vadd.f32 %v610, %v783
        %785 = vmatmul.bf16.gmra.mxu0 %v637
        %v786 = vpop.f32.mrf.mxu0
        %v787 = vadd.f32 %v615, %v786
        %v788 = vpop.f32.mrf.mxu0
        %v789 = vadd.f32 %v620, %v788
        %790 = vdwg.mxu0
        %791 = vmatpush.bf16.msra.mxu0 0
        %792 = vmatpush.bf16.msra.mxu0 0
        %793 = vmatpush.bf16.msra.mxu0 0
        %794 = vmatpush.bf16.msra.mxu0 0
        %795 = vmatpush.bf16.msra.mxu0 0
        %796 = vmatpush.bf16.msra.mxu0 0
        %797 = vmatpush.bf16.msra.mxu0 %v590
        %798 = vmatpush.bf16.msra.mxu0 %v574
        %799 = vmatmul.bf16.gmra.mxu0 %v634
        %v800 = vpop.f32.mrf.mxu0
        %v801 = vadd.f32 %v605, %v800
        %v802 = vpop.f32.mrf.mxu0
        %v803 = vadd.f32 %v610, %v802
        %804 = vmatmul.bf16.gmra.mxu0 %v637
        %v805 = vpop.f32.mrf.mxu0
        %v806 = vadd.f32 %v615, %v805
        %v807 = vpop.f32.mrf.mxu0
        %v808 = vadd.f32 %v620, %v807
        %809 = vdwg.mxu0
        %810 = vmatpush.bf16.msra.mxu0 0
        %811 = vmatpush.bf16.msra.mxu0 0
        %812 = vmatpush.bf16.msra.mxu0 0
        %813 = vmatpush.bf16.msra.mxu0 0
        %814 = vmatpush.bf16.msra.mxu0 0
        %815 = vmatpush.bf16.msra.mxu0 0
        %816 = vmatpush.bf16.msra.mxu0 %v591
        %817 = vmatpush.bf16.msra.mxu0 %v575
        %818 = vmatmul.bf16.gmra.mxu0 %v634
        %v819 = vpop.f32.mrf.mxu0
        %v820 = vadd.f32 %v605, %v819
        %v821 = vpop.f32.mrf.mxu0
        %v822 = vadd.f32 %v610, %v821
        %823 = vmatmul.bf16.gmra.mxu0 %v637
        %v824 = vpop.f32.mrf.mxu0
        %v825 = vadd.f32 %v615, %v824
        %v826 = vpop.f32.mrf.mxu0
        %v827 = vadd.f32 %v620, %v826
        %828 = vdwg.mxu0
        %829 = vmatpush.bf16.msra.mxu0 0
        %830 = vmatpush.bf16.msra.mxu0 0
        %831 = vmatpush.bf16.msra.mxu0 0
        %832 = vmatpush.bf16.msra.mxu0 0
        %833 = vmatpush.bf16.msra.mxu0 0
        %834 = vmatpush.bf16.msra.mxu0 0
        %835 = vmatpush.bf16.msra.mxu0 %v592
        %836 = vmatpush.bf16.msra.mxu0 %v576
        %837 = vmatmul.bf16.gmra.mxu0 %v634
        %v838 = vpop.f32.mrf.mxu0
        %v839 = vadd.f32 %v605, %v838
        %v840 = vpop.f32.mrf.mxu0
        %v841 = vadd.f32 %v610, %v840
        %842 = vmatmul.bf16.gmra.mxu0 %v637
        %v843 = vpop.f32.mrf.mxu0
        %v844 = vadd.f32 %v615, %v843
        %v845 = vpop.f32.mrf.mxu0
        %v846 = vadd.f32 %v620, %v845
        %847 = vdwg.mxu0
        %848 = vmatpush.bf16.msra.mxu0 0
        %849 = vmatpush.bf16.msra.mxu0 0
        %850 = vmatpush.bf16.msra.mxu0 0
        %851 = vmatpush.bf16.msra.mxu0 0
        %852 = vmatpush.bf16.msra.mxu0 0
        %853 = vmatpush.bf16.msra.mxu0 0
        %854 = vmatpush.bf16.msra.mxu0 %v593
        %855 = vmatpush.bf16.msra.mxu0 %v577
        %856 = vmatmul.bf16.gmra.mxu0 %v634
        %v857 = vpop.f32.mrf.mxu0
        %v858 = vadd.f32 %v605, %v857
        %v859 = vpop.f32.mrf.mxu0
        %v860 = vadd.f32 %v610, %v859
        %861 = vmatmul.bf16.gmra.mxu0 %v637
        %v862 = vpop.f32.mrf.mxu0
        %v863 = vadd.f32 %v615, %v862
        %v864 = vpop.f32.mrf.mxu0
        %v865 = vadd.f32 %v620, %v864
        %866 = vdwg.mxu0
        %867 = vmatpush.bf16.msra.mxu0 0
        %868 = vmatpush.bf16.msra.mxu0 0
        %869 = vmatpush.bf16.msra.mxu0 0
        %870 = vmatpush.bf16.msra.mxu0 0
        %871 = vmatpush.bf16.msra.mxu0 0
        %872 = vmatpush.bf16.msra.mxu0 0
        %873 = vmatpush.bf16.msra.mxu0 %v594
        %874 = vmatpush.bf16.msra.mxu0 %v578
        %875 = vmatmul.bf16.gmra.mxu0 %v634
        %v876 = vpop.f32.mrf.mxu0
        %v877 = vadd.f32 %v605, %v876
        %v878 = vpop.f32.mrf.mxu0
        %v879 = vadd.f32 %v610, %v878
        %880 = vmatmul.bf16.gmra.mxu0 %v637
        %v881 = vpop.f32.mrf.mxu0
        %v882 = vadd.f32 %v615, %v881
        %v883 = vpop.f32.mrf.mxu0
        %v884 = vadd.f32 %v620, %v883
        %885 = vdwg.mxu0
        %886 = vmatpush.bf16.msra.mxu0 0
        %887 = vmatpush.bf16.msra.mxu0 0
        %888 = vmatpush.bf16.msra.mxu0 0
        %889 = vmatpush.bf16.msra.mxu0 0
        %890 = vmatpush.bf16.msra.mxu0 0
        %891 = vmatpush.bf16.msra.mxu0 0
        %892 = vmatpush.bf16.msra.mxu0 %v595
        %893 = vmatpush.bf16.msra.mxu0 %v579
        %894 = vmatmul.bf16.gmra.mxu0 %v634
        %v895 = vpop.f32.mrf.mxu0
        %v896 = vadd.f32 %v605, %v895
        %v897 = vpop.f32.mrf.mxu0
        %v898 = vadd.f32 %v610, %v897
        %899 = vmatmul.bf16.gmra.mxu0 %v637
        %v900 = vpop.f32.mrf.mxu0
        %v901 = vadd.f32 %v615, %v900
        %v902 = vpop.f32.mrf.mxu0
        %v903 = vadd.f32 %v620, %v902
        %904 = vdwg.mxu0
        %905 = vmatpush.bf16.msra.mxu0 0
        %906 = vmatpush.bf16.msra.mxu0 0
        %907 = vmatpush.bf16.msra.mxu0 0
        %908 = vmatpush.bf16.msra.mxu0 0
        %909 = vmatpush.bf16.msra.mxu0 0
        %910 = vmatpush.bf16.msra.mxu0 0
        %911 = vmatpush.bf16.msra.mxu0 %v596
        %912 = vmatpush.bf16.msra.mxu0 %v580
        %913 = vmatmul.bf16.gmra.mxu0 %v634
        %v914 = vpop.f32.mrf.mxu0
        %v915 = vadd.f32 %v605, %v914
        %v916 = vpop.f32.mrf.mxu0
        %v917 = vadd.f32 %v610, %v916
        %918 = vmatmul.bf16.gmra.mxu0 %v637
        %v919 = vpop.f32.mrf.mxu0
        %v920 = vadd.f32 %v615, %v919
        %v921 = vpop.f32.mrf.mxu0
        %v922 = vadd.f32 %v620, %v921
        %923 = vdwg.mxu0
        %924 = vmatpush.bf16.msra.mxu0 0
        %925 = vmatpush.bf16.msra.mxu0 0
        %926 = vmatpush.bf16.msra.mxu0 0
        %927 = vmatpush.bf16.msra.mxu0 0
        %928 = vmatpush.bf16.msra.mxu0 0
        %929 = vmatpush.bf16.msra.mxu0 0
        %930 = vmatpush.bf16.msra.mxu0 %v597
        %931 = vmatpush.bf16.msra.mxu0 %v581
        %932 = vmatmul.bf16.gmra.mxu0 %v634
        %v933 = vpop.f32.mrf.mxu0
        %v934 = vadd.f32 %v605, %v933
        %v935 = vpop.f32.mrf.mxu0
        %v936 = vadd.f32 %v610, %v935
        %937 = vmatmul.bf16.gmra.mxu0 %v637
        %v938 = vpop.f32.mrf.mxu0
        %v939 = vadd.f32 %v615, %v938
        %v940 = vpop.f32.mrf.mxu0
        %v941 = vadd.f32 %v620, %v940
        %942 = vdwg.mxu0
        %v943 = vtanh.pop %v649
        %v944 = vtanh.pop %v668
        %v945 = vtanh.pop %v687
        %v946 = vtanh.pop %v706
        %v947 = vtanh.pop %v725
        %v948 = vtanh.pop %v744
        %v949 = vtanh.pop %v763
        %v950 = vtanh.pop %v782
        %v951 = vtanh.pop %v801
        %v952 = vtanh.pop %v820
        %v953 = vtanh.pop %v839
        %v954 = vtanh.pop %v858
        %v955 = vtanh.pop %v877
        %v956 = vtanh.pop %v896
        %v957 = vtanh.pop %v915
        %v958 = vtanh.pop %v934
        %v959 = vtanh.pop %v651
        %v960 = vtanh.pop %v670
        %v961 = vtanh.pop %v689
        %v962 = vtanh.pop %v708
        %v963 = vtanh.pop %v727
        %v964 = vtanh.pop %v746
        %v965 = vtanh.pop %v765
        %v966 = vtanh.pop %v784
        %v967 = vtanh.pop %v803
        %v968 = vtanh.pop %v822
        %v969 = vtanh.pop %v841
        %v970 = vtanh.pop %v860
        %v971 = vtanh.pop %v879
        %v972 = vtanh.pop %v898
        %v973 = vtanh.pop %v917
        %v974 = vtanh.pop %v936
        %v975 = vtanh.pop %v654
        %v976 = vtanh.pop %v673
        %v977 = vtanh.pop %v692
        %v978 = vtanh.pop %v711
        %v979 = vtanh.pop %v730
        %v980 = vtanh.pop %v749
        %v981 = vtanh.pop %v768
        %v982 = vtanh.pop %v787
        %v983 = vtanh.pop %v806
        %v984 = vtanh.pop %v825
        %v985 = vtanh.pop %v844
        %v986 = vtanh.pop %v863
        %v987 = vtanh.pop %v882
        %v988 = vtanh.pop %v901
        %v989 = vtanh.pop %v920
        %v990 = vtanh.pop %v939
        %v991 = vtanh.pop %v656
        %v992 = vtanh.pop %v675
        %v993 = vtanh.pop %v694
        %v994 = vtanh.pop %v713
        %v995 = vtanh.pop %v732
        %v996 = vtanh.pop %v751
        %v997 = vtanh.pop %v770
        %v998 = vtanh.pop %v789
        %v999 = vtanh.pop %v808
        %v1000 = vtanh.pop %v827
        %v1001 = vtanh.pop %v846
        %v1002 = vtanh.pop %v865
        %v1003 = vtanh.pop %v884
        %v1004 = vtanh.pop %v903
        %v1005 = vtanh.pop %v922
        %v1006 = vtanh.pop %v941
        %v1007 = vld [vmem:[%s5] sm:$0xf]
        %v1008 = vld [vmem:[%s5 + $0x4] sm:$0x1]
        %v1009 = vpack.c.bf16 %v959, %v943
        %v1010 = vpack.c.bf16 %v960, %v944
        %v1011 = vpack.c.bf16 %v961, %v945
        %v1012 = vpack.c.bf16 %v962, %v946
        %v1013 = vpack.c.bf16 %v963, %v947
        %v1014 = vpack.c.bf16 %v964, %v948
        %v1015 = vpack.c.bf16 %v965, %v949
        %v1016 = vpack.c.bf16 %v966, %v950
        %v1017 = vpack.c.bf16 %v967, %v951
        %v1018 = vpack.c.bf16 %v968, %v952
        %v1019 = vpack.c.bf16 %v969, %v953
        %v1020 = vpack.c.bf16 %v970, %v954
        %v1021 = vpack.c.bf16 %v971, %v955
        %v1022 = vpack.c.bf16 %v972, %v956
        %v1023 = vpack.c.bf16 %v973, %v957
        %v1024 = vpack.c.bf16 %v974, %v958
        %v1025 = vpack.c.bf16 %v991, %v975
        %v1026 = vpack.c.bf16 %v992, %v976
        %v1027 = vpack.c.bf16 %v993, %v977
        %v1028 = vpack.c.bf16 %v994, %v978
        %v1029 = vpack.c.bf16 %v995, %v979
        %v1030 = vpack.c.bf16 %v996, %v980
        %v1031 = vpack.c.bf16 %v997, %v981
        %v1032 = vpack.c.bf16 %v998, %v982
        %v1033 = vpack.c.bf16 %v999, %v983
        %v1034 = vpack.c.bf16 %v1000, %v984
        %v1035 = vpack.c.bf16 %v1001, %v985
        %v1036 = vpack.c.bf16 %v1002, %v986
        %v1037 = vpack.c.bf16 %v1003, %v987
        %v1038 = vpack.c.bf16 %v1004, %v988
        %v1039 = vpack.c.bf16 %v1005, %v989
        %v1040 = vpack.c.bf16 %v1006, %v990
        %v1041 = vld [vmem:[%s6] sm:$0xff]
        %v1042 = vld [vmem:[%s6 + $0x8] sm:$0x3]
        %1044 = vset.pattern.permute.xlu0 0
        %1045 = vperm.xlu0 %1044, %v1041
        %v1046 = vpop.permute.xlu0 %1045
        %1049 = vset.pattern.permute.xlu0 0
        %1050 = vperm.xlu0 %1049, %v1042
        %v1051 = vpop.permute.xlu0 %1050
        %v1055 = vunpack.c.l.b16 %v1007
        %v1056 = vunpack.c.l.b16 %v1008
        %v1057 = vpack.c.b16 %v1056, %v1055
        %v1059 = vsel %vm632, %v1057, 0
        %1061 = vmatpush.bf16.msra.mxu0 0
        %1062 = vmatpush.bf16.msra.mxu0 0
        %1063 = vmatpush.bf16.msra.mxu0 0
        %1064 = vmatpush.bf16.msra.mxu0 0
        %1065 = vmatpush.bf16.msra.mxu0 0
        %1066 = vmatpush.bf16.msra.mxu0 0
        %1067 = vmatpush.bf16.msra.mxu0 %v1025
        %1068 = vmatpush.bf16.msra.mxu0 %v1009
        %1069 = vmatmul.bf16.gmra.mxu0 %v1059
        %v1070 = vpop.f32.mrf.mxu0
        %v1071 = vadd.f32 %v1046, %v1070
        %v1072 = vpop.f32.mrf.mxu0
        %v1073 = vadd.f32 %v1051, %v1072
        %1074 = vdwg.mxu0
        %1075 = vmatpush.bf16.msra.mxu0 0
        %1076 = vmatpush.bf16.msra.mxu0 0
        %1077 = vmatpush.bf16.msra.mxu0 0
        %1078 = vmatpush.bf16.msra.mxu0 0
        %1079 = vmatpush.bf16.msra.mxu0 0
        %1080 = vmatpush.bf16.msra.mxu0 0
        %1081 = vmatpush.bf16.msra.mxu0 %v1026
        %1082 = vmatpush.bf16.msra.mxu0 %v1010
        %1083 = vmatmul.bf16.gmra.mxu0 %v1059
        %v1084 = vpop.f32.mrf.mxu0
        %v1085 = vadd.f32 %v1046, %v1084
        %v1086 = vpop.f32.mrf.mxu0
        %v1087 = vadd.f32 %v1051, %v1086
        %1088 = vdwg.mxu0
        %1089 = vmatpush.bf16.msra.mxu0 0
        %1090 = vmatpush.bf16.msra.mxu0 0
        %1091 = vmatpush.bf16.msra.mxu0 0
        %1092 = vmatpush.bf16.msra.mxu0 0
        %1093 = vmatpush.bf16.msra.mxu0 0
        %1094 = vmatpush.bf16.msra.mxu0 0
        %1095 = vmatpush.bf16.msra.mxu0 %v1027
        %1096 = vmatpush.bf16.msra.mxu0 %v1011
        %1097 = vmatmul.bf16.gmra.mxu0 %v1059
        %v1098 = vpop.f32.mrf.mxu0
        %v1099 = vadd.f32 %v1046, %v1098
        %v1100 = vpop.f32.mrf.mxu0
        %v1101 = vadd.f32 %v1051, %v1100
        %1102 = vdwg.mxu0
        %1103 = vmatpush.bf16.msra.mxu0 0
        %1104 = vmatpush.bf16.msra.mxu0 0
        %1105 = vmatpush.bf16.msra.mxu0 0
        %1106 = vmatpush.bf16.msra.mxu0 0
        %1107 = vmatpush.bf16.msra.mxu0 0
        %1108 = vmatpush.bf16.msra.mxu0 0
        %1109 = vmatpush.bf16.msra.mxu0 %v1028
        %1110 = vmatpush.bf16.msra.mxu0 %v1012
        %1111 = vmatmul.bf16.gmra.mxu0 %v1059
        %v1112 = vpop.f32.mrf.mxu0
        %v1113 = vadd.f32 %v1046, %v1112
        %v1114 = vpop.f32.mrf.mxu0
        %v1115 = vadd.f32 %v1051, %v1114
        %1116 = vdwg.mxu0
        %1117 = vmatpush.bf16.msra.mxu0 0
        %1118 = vmatpush.bf16.msra.mxu0 0
        %1119 = vmatpush.bf16.msra.mxu0 0
        %1120 = vmatpush.bf16.msra.mxu0 0
        %1121 = vmatpush.bf16.msra.mxu0 0
        %1122 = vmatpush.bf16.msra.mxu0 0
        %1123 = vmatpush.bf16.msra.mxu0 %v1029
        %1124 = vmatpush.bf16.msra.mxu0 %v1013
        %1125 = vmatmul.bf16.gmra.mxu0 %v1059
        %v1126 = vpop.f32.mrf.mxu0
        %v1127 = vadd.f32 %v1046, %v1126
        %v1128 = vpop.f32.mrf.mxu0
        %v1129 = vadd.f32 %v1051, %v1128
        %1130 = vdwg.mxu0
        %1131 = vmatpush.bf16.msra.mxu0 0
        %1132 = vmatpush.bf16.msra.mxu0 0
        %1133 = vmatpush.bf16.msra.mxu0 0
        %1134 = vmatpush.bf16.msra.mxu0 0
        %1135 = vmatpush.bf16.msra.mxu0 0
        %1136 = vmatpush.bf16.msra.mxu0 0
        %1137 = vmatpush.bf16.msra.mxu0 %v1030
        %1138 = vmatpush.bf16.msra.mxu0 %v1014
        %1139 = vmatmul.bf16.gmra.mxu0 %v1059
        %v1140 = vpop.f32.mrf.mxu0
        %v1141 = vadd.f32 %v1046, %v1140
        %v1142 = vpop.f32.mrf.mxu0
        %v1143 = vadd.f32 %v1051, %v1142
        %1144 = vdwg.mxu0
        %1145 = vmatpush.bf16.msra.mxu0 0
        %1146 = vmatpush.bf16.msra.mxu0 0
        %1147 = vmatpush.bf16.msra.mxu0 0
        %1148 = vmatpush.bf16.msra.mxu0 0
        %1149 = vmatpush.bf16.msra.mxu0 0
        %1150 = vmatpush.bf16.msra.mxu0 0
        %1151 = vmatpush.bf16.msra.mxu0 %v1031
        %1152 = vmatpush.bf16.msra.mxu0 %v1015
        %1153 = vmatmul.bf16.gmra.mxu0 %v1059
        %v1154 = vpop.f32.mrf.mxu0
        %v1155 = vadd.f32 %v1046, %v1154
        %v1156 = vpop.f32.mrf.mxu0
        %v1157 = vadd.f32 %v1051, %v1156
        %1158 = vdwg.mxu0
        %1159 = vmatpush.bf16.msra.mxu0 0
        %1160 = vmatpush.bf16.msra.mxu0 0
        %1161 = vmatpush.bf16.msra.mxu0 0
        %1162 = vmatpush.bf16.msra.mxu0 0
        %1163 = vmatpush.bf16.msra.mxu0 0
        %1164 = vmatpush.bf16.msra.mxu0 0
        %1165 = vmatpush.bf16.msra.mxu0 %v1032
        %1166 = vmatpush.bf16.msra.mxu0 %v1016
        %1167 = vmatmul.bf16.gmra.mxu0 %v1059
        %v1168 = vpop.f32.mrf.mxu0
        %v1169 = vadd.f32 %v1046, %v1168
        %v1170 = vpop.f32.mrf.mxu0
        %v1171 = vadd.f32 %v1051, %v1170
        %1172 = vdwg.mxu0
        %1173 = vmatpush.bf16.msra.mxu0 0
        %1174 = vmatpush.bf16.msra.mxu0 0
        %1175 = vmatpush.bf16.msra.mxu0 0
        %1176 = vmatpush.bf16.msra.mxu0 0
        %1177 = vmatpush.bf16.msra.mxu0 0
        %1178 = vmatpush.bf16.msra.mxu0 0
        %1179 = vmatpush.bf16.msra.mxu0 %v1033
        %1180 = vmatpush.bf16.msra.mxu0 %v1017
        %1181 = vmatmul.bf16.gmra.mxu0 %v1059
        %v1182 = vpop.f32.mrf.mxu0
        %v1183 = vadd.f32 %v1046, %v1182
        %v1184 = vpop.f32.mrf.mxu0
        %v1185 = vadd.f32 %v1051, %v1184
        %1186 = vdwg.mxu0
        %1187 = vmatpush.bf16.msra.mxu0 0
        %1188 = vmatpush.bf16.msra.mxu0 0
        %1189 = vmatpush.bf16.msra.mxu0 0
        %1190 = vmatpush.bf16.msra.mxu0 0
        %1191 = vmatpush.bf16.msra.mxu0 0
        %1192 = vmatpush.bf16.msra.mxu0 0
        %1193 = vmatpush.bf16.msra.mxu0 %v1034
        %1194 = vmatpush.bf16.msra.mxu0 %v1018
        %1195 = vmatmul.bf16.gmra.mxu0 %v1059
        %v1196 = vpop.f32.mrf.mxu0
        %v1197 = vadd.f32 %v1046, %v1196
        %v1198 = vpop.f32.mrf.mxu0
        %v1199 = vadd.f32 %v1051, %v1198
        %1200 = vdwg.mxu0
        %1201 = vmatpush.bf16.msra.mxu0 0
        %1202 = vmatpush.bf16.msra.mxu0 0
        %1203 = vmatpush.bf16.msra.mxu0 0
        %1204 = vmatpush.bf16.msra.mxu0 0
        %1205 = vmatpush.bf16.msra.mxu0 0
        %1206 = vmatpush.bf16.msra.mxu0 0
        %1207 = vmatpush.bf16.msra.mxu0 %v1035
        %1208 = vmatpush.bf16.msra.mxu0 %v1019
        %1209 = vmatmul.bf16.gmra.mxu0 %v1059
        %v1210 = vpop.f32.mrf.mxu0
        %v1211 = vadd.f32 %v1046, %v1210
        %v1212 = vpop.f32.mrf.mxu0
        %v1213 = vadd.f32 %v1051, %v1212
        %1214 = vdwg.mxu0
        %1215 = vmatpush.bf16.msra.mxu0 0
        %1216 = vmatpush.bf16.msra.mxu0 0
        %1217 = vmatpush.bf16.msra.mxu0 0
        %1218 = vmatpush.bf16.msra.mxu0 0
        %1219 = vmatpush.bf16.msra.mxu0 0
        %1220 = vmatpush.bf16.msra.mxu0 0
        %1221 = vmatpush.bf16.msra.mxu0 %v1036
        %1222 = vmatpush.bf16.msra.mxu0 %v1020
        %1223 = vmatmul.bf16.gmra.mxu0 %v1059
        %v1224 = vpop.f32.mrf.mxu0
        %v1225 = vadd.f32 %v1046, %v1224
        %v1226 = vpop.f32.mrf.mxu0
        %v1227 = vadd.f32 %v1051, %v1226
        %1228 = vdwg.mxu0
        %1229 = vmatpush.bf16.msra.mxu0 0
        %1230 = vmatpush.bf16.msra.mxu0 0
        %1231 = vmatpush.bf16.msra.mxu0 0
        %1232 = vmatpush.bf16.msra.mxu0 0
        %1233 = vmatpush.bf16.msra.mxu0 0
        %1234 = vmatpush.bf16.msra.mxu0 0
        %1235 = vmatpush.bf16.msra.mxu0 %v1037
        %1236 = vmatpush.bf16.msra.mxu0 %v1021
        %1237 = vmatmul.bf16.gmra.mxu0 %v1059
        %v1238 = vpop.f32.mrf.mxu0
        %v1239 = vadd.f32 %v1046, %v1238
        %v1240 = vpop.f32.mrf.mxu0
        %v1241 = vadd.f32 %v1051, %v1240
        %1242 = vdwg.mxu0
        %1243 = vmatpush.bf16.msra.mxu0 0
        %1244 = vmatpush.bf16.msra.mxu0 0
        %1245 = vmatpush.bf16.msra.mxu0 0
        %1246 = vmatpush.bf16.msra.mxu0 0
        %1247 = vmatpush.bf16.msra.mxu0 0
        %1248 = vmatpush.bf16.msra.mxu0 0
        %1249 = vmatpush.bf16.msra.mxu0 %v1038
        %1250 = vmatpush.bf16.msra.mxu0 %v1022
        %1251 = vmatmul.bf16.gmra.mxu0 %v1059
        %v1252 = vpop.f32.mrf.mxu0
        %v1253 = vadd.f32 %v1046, %v1252
        %v1254 = vpop.f32.mrf.mxu0
        %v1255 = vadd.f32 %v1051, %v1254
        %1256 = vdwg.mxu0
        %1257 = vmatpush.bf16.msra.mxu0 0
        %1258 = vmatpush.bf16.msra.mxu0 0
        %1259 = vmatpush.bf16.msra.mxu0 0
        %1260 = vmatpush.bf16.msra.mxu0 0
        %1261 = vmatpush.bf16.msra.mxu0 0
        %1262 = vmatpush.bf16.msra.mxu0 0
        %1263 = vmatpush.bf16.msra.mxu0 %v1039
        %1264 = vmatpush.bf16.msra.mxu0 %v1023
        %1265 = vmatmul.bf16.gmra.mxu0 %v1059
        %v1266 = vpop.f32.mrf.mxu0
        %v1267 = vadd.f32 %v1046, %v1266
        %v1268 = vpop.f32.mrf.mxu0
        %v1269 = vadd.f32 %v1051, %v1268
        %1270 = vdwg.mxu0
        %1271 = vmatpush.bf16.msra.mxu0 0
        %1272 = vmatpush.bf16.msra.mxu0 0
        %1273 = vmatpush.bf16.msra.mxu0 0
        %1274 = vmatpush.bf16.msra.mxu0 0
        %1275 = vmatpush.bf16.msra.mxu0 0
        %1276 = vmatpush.bf16.msra.mxu0 0
        %1277 = vmatpush.bf16.msra.mxu0 %v1040
        %1278 = vmatpush.bf16.msra.mxu0 %v1024
        %1279 = vmatmul.bf16.gmra.mxu0 %v1059
        %v1280 = vpop.f32.mrf.mxu0
        %v1281 = vadd.f32 %v1046, %v1280
        %v1282 = vpop.f32.mrf.mxu0
        %v1283 = vadd.f32 %v1051, %v1282
        %1284 = vdwg.mxu0
        %v1285 = vand.u32 2147483647, %v285
        %vm1286 = vcmp.le.f32.partialorder %v1285, 0.7853982
        %vm1287 = vcmp.lt.s32.totalorder %v285, 0
        %v1288 = vand.u32 %v285, 2139095040
        %v1289 = vshrl.u32 %v1288, 23
        %v1290 = vsub.s32 %v1289, 127
        %v1291 = vand.u32 2147483647, %v285
        %v1292 = vand.u32 %v1291, 8388607
        %v1293 = vor.u32 %v1292, 8388608
        %v1294 = vsub.s32 0, %v1293
        %v1295 = vadd.s32 %v1290, 1
        %vm1296 = vcmp.gt.s32.totalorder %v1295, 0
        %v1297 = vsel %vm1296, %v1295, 0
        %v1298 = vshrl.u32 %v1297, 5
        %v1299 = vand.u32 %v1297, 31
        %v1300 = vsub.s32 32, %v1299
        %v1301 = vshrl.u32 683565275, %v1300
        %v1302 = vshll.u32 683565275, %v1299
        %v1303 = vshrl.u32 2475754826, %v1300
        %v1304 = vor.u32 %v1302, %v1303
        %v1305 = vshll.u32 2475754826, %v1299
        %v1306 = vshrl.u32 2131351028, %v1300
        %v1307 = vor.u32 %v1305, %v1306
        %v1308 = vshll.u32 2131351028, %v1299
        %v1309 = vshrl.u32 2102212464, %v1300
        %v1310 = vor.u32 %v1308, %v1309
        %v1311 = vshll.u32 2102212464, %v1299
        %v1312 = vshrl.u32 920167782, %v1300
        %v1313 = vor.u32 %v1311, %v1312
        %v1314 = vshll.u32 920167782, %v1299
        %v1315 = vshrl.u32 1326507024, %v1300
        %v1316 = vor.u32 %v1314, %v1315
        %vm1317 = vcmp.lt.s32.totalorder %v1298, 1
        %vm1318 = vcmp.lt.s32.totalorder %v1298, 2
        %vm1319 = vcmp.lt.s32.totalorder %v1298, 3
        %vm1320 = vcmp.lt.s32.totalorder %v1298, 4
        %v1321 = vsel %vm1317, %v1301, %v1304
        %v1322 = vsel %vm1320, %v1310, 2102212464
        %v1323 = vsel %vm1319, %v1307, %v1322
        %v1324 = vsel %vm1318, %v1321, %v1323
        %v1325 = vsel %vm1317, %v1304, %v1307
        %v1326 = vsel %vm1320, %v1313, 920167782
        %v1327 = vsel %vm1319, %v1310, %v1326
        %v1328 = vsel %vm1318, %v1325, %v1327
        %v1329 = vsel %vm1317, %v1307, %v1310
        %v1330 = vsel %vm1320, %v1316, 1326507024
        %v1331 = vsel %vm1319, %v1313, %v1330
        %v1332 = vsel %vm1318, %v1329, %v1331
        %v1333 = vshll.u32 %v1293, 8
        %v1334 = vand.u32 %v1333, 65535
        %v1335 = vshrl.u32 %v1333, 16
        %v1336 = vand.u32 %v1332, 65535
        %v1337 = vshrl.u32 %v1332, 16
        %v1338 = vmul.u32 %v1334, %v1336
        %v1339 = vmul.u32 %v1334, %v1337
        %v1340 = vmul.u32 %v1335, %v1336
        %v1341 = vmul.u32 %v1335, %v1337
        %v1342 = vshll.u32 %v1339, 16
        %v1343 = vshrl.u32 %v1339, 16
        %v1344 = vshll.u32 %v1340, 16
        %v1345 = vshrl.u32 %v1340, 16
        %vm1346 = vc.u32 %v1338, %v1342
        %v1347 = vsel %vm1346, 1, 0
        %v1348 = vadd.s32 %v1338, %v1342
        %v1349 = vadd.s32 %v1341, %v1347
        %vm1350 = vc.u32 %v1348, %v1344
        %v1351 = vsel %vm1350, 1, 0
        %v1352 = vadd.s32 %v1348, %v1344
        %v1353 = vadd.s32 %v1349, %v1351
        %v1354 = vadd.s32 %v1353, %v1343
        %v1355 = vadd.s32 %v1354, %v1345
        %v1356 = vand.u32 %v1333, 65535
        %v1357 = vshrl.u32 %v1333, 16
        %v1358 = vand.u32 %v1328, 65535
        %v1359 = vshrl.u32 %v1328, 16
        %v1360 = vmul.u32 %v1356, %v1358
        %v1361 = vmul.u32 %v1356, %v1359
        %v1362 = vmul.u32 %v1357, %v1358
        %v1363 = vmul.u32 %v1357, %v1359
        %v1364 = vshll.u32 %v1361, 16
        %v1365 = vshrl.u32 %v1361, 16
        %v1366 = vshll.u32 %v1362, 16
        %v1367 = vshrl.u32 %v1362, 16
        %vm1368 = vc.u32 %v1360, %v1364
        %v1369 = vsel %vm1368, 1, 0
        %v1370 = vadd.s32 %v1360, %v1364
        %v1371 = vadd.s32 %v1363, %v1369
        %vm1372 = vc.u32 %v1370, %v1366
        %v1373 = vsel %vm1372, 1, 0
        %v1374 = vadd.s32 %v1370, %v1366
        %v1375 = vadd.s32 %v1371, %v1373
        %v1376 = vadd.s32 %v1375, %v1365
        %v1377 = vadd.s32 %v1376, %v1367
        %v1378 = vmul.u32 %v1333, %v1324
        %v1379 = vadd.s32 %v1355, %v1374
        %vm1380 = vc.u32 %v1355, %v1374
        %v1381 = vadd.s32 %v1377, 1
        %v1382 = vsel %vm1380, %v1381, %v1377
        %v1383 = vadd.s32 %v1378, %v1382
        %v1384 = vadd.s32 %v1383, 536870912
        %v1385 = vshrl.u32 %v1384, 30
        %v1386 = vshll.u32 %v1385, 30
        %v1387 = vsub.s32 %v1383, %v1386
        %vm1388 = vcmp.lt.s32.totalorder %v1387, 0
        %v1389 = vsub.s32 0, %v1387
        %v1390 = vsel %vm1388, %v1389, %v1387
        %v1391 = vclz %v1390
        %v1392 = vsub.s32 %v1391, 2
        %vm1393 = vcmp.gt.s32.totalorder 0, %v1392
        %v1394 = vsel %vm1393, 0, %v1392
        %v1395 = vsub.s32 32, %v1394
        %v1396 = vshll.u32 %v1387, %v1394
        %v1397 = vshrl.u32 %v1379, %v1395
        %v1398 = vor.u32 %v1396, %v1397
        %v1399 = vsub.s32 4294967266, %v1394
        %v1400 = vadd.s32 %v1399, 127
        %v1401 = vshll.u32 %v1400, 23
        %v1402 = vor.u32 4788187, %v1401
        %v1403 = vand.u32 2147483647, %v1402
        %v1405 = vcvt.s32.f32 %v1398
        %v1406 = vmul.f32 %v1405, %v1403
        %v1407 = vxor.u32 %v1406, 2147483648
        %v1408 = vsel %vm1287, %v1407, %v1406
        %v1409 = vsub.s32 4, %v1385
        %v1410 = vsel %vm1287, %v1409, %v1385
        %v1411 = vsel %vm1286, %v285, %v1408
        %v1412 = vsel %vm1286, 0, %v1410
        %v1413 = vmul.f32 %v1411, %v1411
        %v1414 = vmul.f32 %v1413, -0.001358992
        %v1415 = vadd.f32 %v1414, 0.041655596
        %v1416 = vmul.f32 %v1413, %v1415
        %v1417 = vadd.f32 %v1416, -0.4999988
        %v1418 = vmul.f32 %v1413, %v1417
        %v1419 = vadd.f32 1.0, %v1418
        %v1420 = vmul.f32 %v1411, %v1411
        %v1421 = vmul.f32 %v1420, -0.00019511016
        %v1422 = vadd.f32 %v1421, 0.008332121
        %v1423 = vmul.f32 %v1420, %v1422
        %v1424 = vadd.f32 %v1423, -0.16666654
        %v1425 = vmul.f32 %v1420, %v1424
        %v1426 = vadd.f32 %v1425, 1.0
        %v1427 = vmul.f32 %v1426, %v1411
        %vm1428 = vweird.f32 %v285
        %v1429 = vand.u32 %v1412, 3
        %vm1430 = vcmp.lt.s32.totalorder %v1429, 2
        %vm1431 = vcmp.eq.s32.totalorder %v1429, 0
        %v1432 = vxor.u32 %v1427, 2147483648
        %v1433 = vsel %vm1431, %v1419, %v1432
        %vm1434 = vcmp.eq.s32.totalorder %v1429, 2
        %v1435 = vxor.u32 %v1419, 2147483648
        %v1436 = vsel %vm1434, %v1435, %v1427
        %v1437 = vsel %vm1430, %v1433, %v1436
        %v1438 = vsel %vm1428, nan, %v1437
        %v1439 = vand.u32 2147483647, %v287
        %vm1440 = vcmp.le.f32.partialorder %v1439, 0.7853982
        %vm1441 = vcmp.lt.s32.totalorder %v287, 0
        %v1442 = vand.u32 %v287, 2139095040
        %v1443 = vshrl.u32 %v1442, 23
        %v1444 = vsub.s32 %v1443, 127
        %v1445 = vand.u32 2147483647, %v287
        %v1446 = vand.u32 %v1445, 8388607
        %v1447 = vor.u32 %v1446, 8388608
        %v1448 = vsub.s32 0, %v1447
        %v1449 = vadd.s32 %v1444, 1
        %vm1450 = vcmp.gt.s32.totalorder %v1449, 0
        %v1451 = vsel %vm1450, %v1449, 0
        %v1452 = vshrl.u32 %v1451, 5
        %v1453 = vand.u32 %v1451, 31
        %v1454 = vsub.s32 32, %v1453
        %v1455 = vshrl.u32 683565275, %v1454
        %v1456 = vshll.u32 683565275, %v1453
        %v1457 = vshrl.u32 2475754826, %v1454
        %v1458 = vor.u32 %v1456, %v1457
        %v1459 = vshll.u32 2475754826, %v1453
        %v1460 = vshrl.u32 2131351028, %v1454
        %v1461 = vor.u32 %v1459, %v1460
        %v1462 = vshll.u32 2131351028, %v1453
        %v1463 = vshrl.u32 2102212464, %v1454
        %v1464 = vor.u32 %v1462, %v1463
        %v1465 = vshll.u32 2102212464, %v1453
        %v1466 = vshrl.u32 920167782, %v1454
        %v1467 = vor.u32 %v1465, %v1466
        %v1468 = vshll.u32 920167782, %v1453
        %v1469 = vshrl.u32 1326507024, %v1454
        %v1470 = vor.u32 %v1468, %v1469
        %vm1471 = vcmp.lt.s32.totalorder %v1452, 1
        %vm1472 = vcmp.lt.s32.totalorder %v1452, 2
        %vm1473 = vcmp.lt.s32.totalorder %v1452, 3
        %vm1474 = vcmp.lt.s32.totalorder %v1452, 4
        %v1475 = vsel %vm1471, %v1455, %v1458
        %v1476 = vsel %vm1474, %v1464, 2102212464
        %v1477 = vsel %vm1473, %v1461, %v1476
        %v1478 = vsel %vm1472, %v1475, %v1477
        %v1479 = vsel %vm1471, %v1458, %v1461
        %v1480 = vsel %vm1474, %v1467, 920167782
        %v1481 = vsel %vm1473, %v1464, %v1480
        %v1482 = vsel %vm1472, %v1479, %v1481
        %v1483 = vsel %vm1471, %v1461, %v1464
        %v1484 = vsel %vm1474, %v1470, 1326507024
        %v1485 = vsel %vm1473, %v1467, %v1484
        %v1486 = vsel %vm1472, %v1483, %v1485
        %v1487 = vshll.u32 %v1447, 8
        %v1488 = vand.u32 %v1487, 65535
        %v1489 = vshrl.u32 %v1487, 16
        %v1490 = vand.u32 %v1486, 65535
        %v1491 = vshrl.u32 %v1486, 16
        %v1492 = vmul.u32 %v1488, %v1490
        %v1493 = vmul.u32 %v1488, %v1491
        %v1494 = vmul.u32 %v1489, %v1490
        %v1495 = vmul.u32 %v1489, %v1491
        %v1496 = vshll.u32 %v1493, 16
        %v1497 = vshrl.u32 %v1493, 16
        %v1498 = vshll.u32 %v1494, 16
        %v1499 = vshrl.u32 %v1494, 16
        %vm1500 = vc.u32 %v1492, %v1496
        %v1501 = vsel %vm1500, 1, 0
        %v1502 = vadd.s32 %v1492, %v1496
        %v1503 = vadd.s32 %v1495, %v1501
        %vm1504 = vc.u32 %v1502, %v1498
        %v1505 = vsel %vm1504, 1, 0
        %v1506 = vadd.s32 %v1502, %v1498
        %v1507 = vadd.s32 %v1503, %v1505
        %v1508 = vadd.s32 %v1507, %v1497
        %v1509 = vadd.s32 %v1508, %v1499
        %v1510 = vand.u32 %v1487, 65535
        %v1511 = vshrl.u32 %v1487, 16
        %v1512 = vand.u32 %v1482, 65535
        %v1513 = vshrl.u32 %v1482, 16
        %v1514 = vmul.u32 %v1510, %v1512
        %v1515 = vmul.u32 %v1510, %v1513
        %v1516 = vmul.u32 %v1511, %v1512
        %v1517 = vmul.u32 %v1511, %v1513
        %v1518 = vshll.u32 %v1515, 16
        %v1519 = vshrl.u32 %v1515, 16
        %v1520 = vshll.u32 %v1516, 16
        %v1521 = vshrl.u32 %v1516, 16
        %vm1522 = vc.u32 %v1514, %v1518
        %v1523 = vsel %vm1522, 1, 0
        %v1524 = vadd.s32 %v1514, %v1518
        %v1525 = vadd.s32 %v1517, %v1523
        %vm1526 = vc.u32 %v1524, %v1520
        %v1527 = vsel %vm1526, 1, 0
        %v1528 = vadd.s32 %v1524, %v1520
        %v1529 = vadd.s32 %v1525, %v1527
        %v1530 = vadd.s32 %v1529, %v1519
        %v1531 = vadd.s32 %v1530, %v1521
        %v1532 = vmul.u32 %v1487, %v1478
        %v1533 = vadd.s32 %v1509, %v1528
        %vm1534 = vc.u32 %v1509, %v1528
        %v1535 = vadd.s32 %v1531, 1
        %v1536 = vsel %vm1534, %v1535, %v1531
        %v1537 = vadd.s32 %v1532, %v1536
        %v1538 = vadd.s32 %v1537, 536870912
        %v1539 = vshrl.u32 %v1538, 30
        %v1540 = vshll.u32 %v1539, 30
        %v1541 = vsub.s32 %v1537, %v1540
        %vm1542 = vcmp.lt.s32.totalorder %v1541, 0
        %v1543 = vsub.s32 0, %v1541
        %v1544 = vsel %vm1542, %v1543, %v1541
        %v1545 = vclz %v1544
        %v1546 = vsub.s32 %v1545, 2
        %vm1547 = vcmp.gt.s32.totalorder 0, %v1546
        %v1548 = vsel %vm1547, 0, %v1546
        %v1549 = vsub.s32 32, %v1548
        %v1550 = vshll.u32 %v1541, %v1548
        %v1551 = vshrl.u32 %v1533, %v1549
        %v1552 = vor.u32 %v1550, %v1551
        %v1553 = vsub.s32 4294967266, %v1548
        %v1554 = vadd.s32 %v1553, 127
        %v1555 = vshll.u32 %v1554, 23
        %v1556 = vor.u32 4788187, %v1555
        %v1557 = vand.u32 2147483647, %v1556
        %v1559 = vcvt.s32.f32 %v1552
        %v1560 = vmul.f32 %v1559, %v1557
        %v1561 = vxor.u32 %v1560, 2147483648
        %v1562 = vsel %vm1441, %v1561, %v1560
        %v1563 = vsub.s32 4, %v1539
        %v1564 = vsel %vm1441, %v1563, %v1539
        %v1565 = vsel %vm1440, %v287, %v1562
        %v1566 = vsel %vm1440, 0, %v1564
        %v1567 = vmul.f32 %v1565, %v1565
        %v1568 = vmul.f32 %v1567, -0.001358992
        %v1569 = vadd.f32 %v1568, 0.041655596
        %v1570 = vmul.f32 %v1567, %v1569
        %v1571 = vadd.f32 %v1570, -0.4999988
        %v1572 = vmul.f32 %v1567, %v1571
        %v1573 = vadd.f32 1.0, %v1572
        %v1574 = vmul.f32 %v1565, %v1565
        %v1575 = vmul.f32 %v1574, -0.00019511016
        %v1576 = vadd.f32 %v1575, 0.008332121
        %v1577 = vmul.f32 %v1574, %v1576
        %v1578 = vadd.f32 %v1577, -0.16666654
        %v1579 = vmul.f32 %v1574, %v1578
        %v1580 = vadd.f32 %v1579, 1.0
        %v1581 = vmul.f32 %v1580, %v1565
        %vm1582 = vweird.f32 %v287
        %v1583 = vand.u32 %v1566, 3
        %vm1584 = vcmp.lt.s32.totalorder %v1583, 2
        %vm1585 = vcmp.eq.s32.totalorder %v1583, 0
        %v1586 = vxor.u32 %v1581, 2147483648
        %v1587 = vsel %vm1585, %v1573, %v1586
        %vm1588 = vcmp.eq.s32.totalorder %v1583, 2
        %v1589 = vxor.u32 %v1573, 2147483648
        %v1590 = vsel %vm1588, %v1589, %v1581
        %v1591 = vsel %vm1584, %v1587, %v1590
        %v1592 = vsel %vm1582, nan, %v1591
        %v1595 = vperm.slane %v1438, 0
        %v1596 = vperm.slane %v1438, 1
        %v1597 = vperm.slane %v1438, 2
        %v1598 = vperm.slane %v1438, 3
        %v1599 = vperm.slane %v1438, 4
        %v1600 = vperm.slane %v1438, 5
        %v1601 = vperm.slane %v1438, 6
        %v1602 = vperm.slane %v1438, 7
        %v1603 = vperm.slane %v1592, 0
        %v1604 = vperm.slane %v1592, 1
        %v1605 = vperm.slane %v1592, 2
        %v1606 = vperm.slane %v1592, 3
        %v1607 = vperm.slane %v1592, 4
        %v1608 = vperm.slane %v1592, 5
        %v1609 = vperm.slane %v1592, 6
        %v1610 = vperm.slane %v1592, 7
        %v1627 = vmul.f32 %v1071, %v1595
        %v1628 = vmul.f32 %v1085, %v1596
        %v1629 = vmul.f32 %v1099, %v1597
        %v1630 = vmul.f32 %v1113, %v1598
        %v1631 = vmul.f32 %v1127, %v1599
        %v1632 = vmul.f32 %v1141, %v1600
        %v1633 = vmul.f32 %v1155, %v1601
        %v1634 = vmul.f32 %v1169, %v1602
        %v1635 = vmul.f32 %v1183, %v1603
        %v1636 = vmul.f32 %v1197, %v1604
        %v1637 = vmul.f32 %v1211, %v1605
        %v1638 = vmul.f32 %v1225, %v1606
        %v1639 = vmul.f32 %v1239, %v1607
        %v1640 = vmul.f32 %v1253, %v1608
        %v1641 = vmul.f32 %v1267, %v1609
        %v1642 = vmul.f32 %v1281, %v1610
        %v1659 = vrot.slane %v1627, 1
        %v1660 = vrot.slane %v1628, 1
        %v1661 = vrot.slane %v1629, 1
        %v1662 = vrot.slane %v1630, 1
        %v1663 = vrot.slane %v1631, 1
        %v1664 = vrot.slane %v1632, 1
        %v1665 = vrot.slane %v1633, 1
        %v1666 = vrot.slane %v1634, 1
        %v1667 = vrot.slane %v1635, 1
        %v1668 = vrot.slane %v1636, 1
        %v1669 = vrot.slane %v1637, 1
        %v1670 = vrot.slane %v1638, 1
        %v1671 = vrot.slane %v1639, 1
        %v1672 = vrot.slane %v1640, 1
        %v1673 = vrot.slane %v1641, 1
        %v1674 = vrot.slane %v1642, 1
        %v1691 = vadd.f32 %v1071, %v1659
        %v1692 = vadd.f32 %v1085, %v1660
        %v1693 = vadd.f32 %v1099, %v1661
        %v1694 = vadd.f32 %v1113, %v1662
        %v1695 = vadd.f32 %v1127, %v1663
        %v1696 = vadd.f32 %v1141, %v1664
        %v1697 = vadd.f32 %v1155, %v1665
        %v1698 = vadd.f32 %v1169, %v1666
        %v1699 = vadd.f32 %v1183, %v1667
        %v1700 = vadd.f32 %v1197, %v1668
        %v1701 = vadd.f32 %v1211, %v1669
        %v1702 = vadd.f32 %v1225, %v1670
        %v1703 = vadd.f32 %v1239, %v1671
        %v1704 = vadd.f32 %v1253, %v1672
        %v1705 = vadd.f32 %v1267, %v1673
        %v1706 = vadd.f32 %v1281, %v1674
        %v1707 = vmul.f32 %v1438, 1.5
        %v1708 = vmul.f32 %v1592, 1.5
        %v1709 = vmul.f32 %v1707, %v1438
        %v1710 = vmul.f32 %v1708, %v1592
        %v1711 = vsub.f32 %v1709, 0.5
        %v1712 = vsub.f32 %v1710, 0.5
        %v1715 = vperm.slane %v1711, 0
        %v1716 = vperm.slane %v1711, 1
        %v1717 = vperm.slane %v1711, 2
        %v1718 = vperm.slane %v1711, 3
        %v1719 = vperm.slane %v1711, 4
        %v1720 = vperm.slane %v1711, 5
        %v1721 = vperm.slane %v1711, 6
        %v1722 = vperm.slane %v1711, 7
        %v1723 = vperm.slane %v1712, 0
        %v1724 = vperm.slane %v1712, 1
        %v1725 = vperm.slane %v1712, 2
        %v1726 = vperm.slane %v1712, 3
        %v1727 = vperm.slane %v1712, 4
        %v1728 = vperm.slane %v1712, 5
        %v1729 = vperm.slane %v1712, 6
        %v1730 = vperm.slane %v1712, 7
        %v1747 = vmul.f32 %v1071, %v1715
        %v1748 = vmul.f32 %v1085, %v1716
        %v1749 = vmul.f32 %v1099, %v1717
        %v1750 = vmul.f32 %v1113, %v1718
        %v1751 = vmul.f32 %v1127, %v1719
        %v1752 = vmul.f32 %v1141, %v1720
        %v1753 = vmul.f32 %v1155, %v1721
        %v1754 = vmul.f32 %v1169, %v1722
        %v1755 = vmul.f32 %v1183, %v1723
        %v1756 = vmul.f32 %v1197, %v1724
        %v1757 = vmul.f32 %v1211, %v1725
        %v1758 = vmul.f32 %v1225, %v1726
        %v1759 = vmul.f32 %v1239, %v1727
        %v1760 = vmul.f32 %v1253, %v1728
        %v1761 = vmul.f32 %v1267, %v1729
        %v1762 = vmul.f32 %v1281, %v1730
        %v1779 = vrot.slane %v1747, 2
        %v1780 = vrot.slane %v1748, 2
        %v1781 = vrot.slane %v1749, 2
        %v1782 = vrot.slane %v1750, 2
        %v1783 = vrot.slane %v1751, 2
        %v1784 = vrot.slane %v1752, 2
        %v1785 = vrot.slane %v1753, 2
        %v1786 = vrot.slane %v1754, 2
        %v1787 = vrot.slane %v1755, 2
        %v1788 = vrot.slane %v1756, 2
        %v1789 = vrot.slane %v1757, 2
        %v1790 = vrot.slane %v1758, 2
        %v1791 = vrot.slane %v1759, 2
        %v1792 = vrot.slane %v1760, 2
        %v1793 = vrot.slane %v1761, 2
        %v1794 = vrot.slane %v1762, 2
        %v1811 = vadd.f32 %v1691, %v1779
        %v1812 = vadd.f32 %v1692, %v1780
        %v1813 = vadd.f32 %v1693, %v1781
        %v1814 = vadd.f32 %v1694, %v1782
        %v1815 = vadd.f32 %v1695, %v1783
        %v1816 = vadd.f32 %v1696, %v1784
        %v1817 = vadd.f32 %v1697, %v1785
        %v1818 = vadd.f32 %v1698, %v1786
        %v1819 = vadd.f32 %v1699, %v1787
        %v1820 = vadd.f32 %v1700, %v1788
        %v1821 = vadd.f32 %v1701, %v1789
        %v1822 = vadd.f32 %v1702, %v1790
        %v1823 = vadd.f32 %v1703, %v1791
        %v1824 = vadd.f32 %v1704, %v1792
        %v1825 = vadd.f32 %v1705, %v1793
        %v1826 = vadd.f32 %v1706, %v1794
        %v1827 = vmul.f32 %v1438, 1.6666666
        %v1828 = vmul.f32 %v1592, 1.6666666
        %v1829 = vmul.f32 %v1827, %v1711
        %v1830 = vmul.f32 %v1828, %v1712
        %v1831 = vmul.f32 %v1438, 0.6666667
        %v1832 = vmul.f32 %v1592, 0.6666667
        %v1833 = vsub.f32 %v1829, %v1831
        %v1834 = vsub.f32 %v1830, %v1832
        %v1837 = vperm.slane %v1833, 0
        %v1838 = vperm.slane %v1833, 1
        %v1839 = vperm.slane %v1833, 2
        %v1840 = vperm.slane %v1833, 3
        %v1841 = vperm.slane %v1833, 4
        %v1842 = vperm.slane %v1833, 5
        %v1843 = vperm.slane %v1833, 6
        %v1844 = vperm.slane %v1833, 7
        %v1845 = vperm.slane %v1834, 0
        %v1846 = vperm.slane %v1834, 1
        %v1847 = vperm.slane %v1834, 2
        %v1848 = vperm.slane %v1834, 3
        %v1849 = vperm.slane %v1834, 4
        %v1850 = vperm.slane %v1834, 5
        %v1851 = vperm.slane %v1834, 6
        %v1852 = vperm.slane %v1834, 7
        %v1869 = vmul.f32 %v1071, %v1837
        %v1870 = vmul.f32 %v1085, %v1838
        %v1871 = vmul.f32 %v1099, %v1839
        %v1872 = vmul.f32 %v1113, %v1840
        %v1873 = vmul.f32 %v1127, %v1841
        %v1874 = vmul.f32 %v1141, %v1842
        %v1875 = vmul.f32 %v1155, %v1843
        %v1876 = vmul.f32 %v1169, %v1844
        %v1877 = vmul.f32 %v1183, %v1845
        %v1878 = vmul.f32 %v1197, %v1846
        %v1879 = vmul.f32 %v1211, %v1847
        %v1880 = vmul.f32 %v1225, %v1848
        %v1881 = vmul.f32 %v1239, %v1849
        %v1882 = vmul.f32 %v1253, %v1850
        %v1883 = vmul.f32 %v1267, %v1851
        %v1884 = vmul.f32 %v1281, %v1852
        %v1901 = vrot.slane %v1869, 3
        %v1902 = vrot.slane %v1870, 3
        %v1903 = vrot.slane %v1871, 3
        %v1904 = vrot.slane %v1872, 3
        %v1905 = vrot.slane %v1873, 3
        %v1906 = vrot.slane %v1874, 3
        %v1907 = vrot.slane %v1875, 3
        %v1908 = vrot.slane %v1876, 3
        %v1909 = vrot.slane %v1877, 3
        %v1910 = vrot.slane %v1878, 3
        %v1911 = vrot.slane %v1879, 3
        %v1912 = vrot.slane %v1880, 3
        %v1913 = vrot.slane %v1881, 3
        %v1914 = vrot.slane %v1882, 3
        %v1915 = vrot.slane %v1883, 3
        %v1916 = vrot.slane %v1884, 3
        %v1933 = vadd.f32 %v1811, %v1901
        %v1934 = vadd.f32 %v1812, %v1902
        %v1935 = vadd.f32 %v1813, %v1903
        %v1936 = vadd.f32 %v1814, %v1904
        %v1937 = vadd.f32 %v1815, %v1905
        %v1938 = vadd.f32 %v1816, %v1906
        %v1939 = vadd.f32 %v1817, %v1907
        %v1940 = vadd.f32 %v1818, %v1908
        %v1941 = vadd.f32 %v1819, %v1909
        %v1942 = vadd.f32 %v1820, %v1910
        %v1943 = vadd.f32 %v1821, %v1911
        %v1944 = vadd.f32 %v1822, %v1912
        %v1945 = vadd.f32 %v1823, %v1913
        %v1946 = vadd.f32 %v1824, %v1914
        %v1947 = vadd.f32 %v1825, %v1915
        %v1948 = vadd.f32 %v1826, %v1916
        %v1949 = vmul.f32 %v1438, 1.75
        %v1950 = vmul.f32 %v1592, 1.75
        %v1951 = vmul.f32 %v1949, %v1833
        %v1952 = vmul.f32 %v1950, %v1834
        %v1953 = vmul.f32 %v1711, 0.75
        %v1954 = vmul.f32 %v1712, 0.75
        %v1955 = vsub.f32 %v1951, %v1953
        %v1956 = vsub.f32 %v1952, %v1954
        %v1959 = vperm.slane %v1955, 0
        %v1960 = vperm.slane %v1955, 1
        %v1961 = vperm.slane %v1955, 2
        %v1962 = vperm.slane %v1955, 3
        %v1963 = vperm.slane %v1955, 4
        %v1964 = vperm.slane %v1955, 5
        %v1965 = vperm.slane %v1955, 6
        %v1966 = vperm.slane %v1955, 7
        %v1967 = vperm.slane %v1956, 0
        %v1968 = vperm.slane %v1956, 1
        %v1969 = vperm.slane %v1956, 2
        %v1970 = vperm.slane %v1956, 3
        %v1971 = vperm.slane %v1956, 4
        %v1972 = vperm.slane %v1956, 5
        %v1973 = vperm.slane %v1956, 6
        %v1974 = vperm.slane %v1956, 7
        %v1991 = vmul.f32 %v1071, %v1959
        %v1992 = vmul.f32 %v1085, %v1960
        %v1993 = vmul.f32 %v1099, %v1961
        %v1994 = vmul.f32 %v1113, %v1962
        %v1995 = vmul.f32 %v1127, %v1963
        %v1996 = vmul.f32 %v1141, %v1964
        %v1997 = vmul.f32 %v1155, %v1965
        %v1998 = vmul.f32 %v1169, %v1966
        %v1999 = vmul.f32 %v1183, %v1967
        %v2000 = vmul.f32 %v1197, %v1968
        %v2001 = vmul.f32 %v1211, %v1969
        %v2002 = vmul.f32 %v1225, %v1970
        %v2003 = vmul.f32 %v1239, %v1971
        %v2004 = vmul.f32 %v1253, %v1972
        %v2005 = vmul.f32 %v1267, %v1973
        %v2006 = vmul.f32 %v1281, %v1974
        %v2023 = vrot.slane %v1991, 4
        %v2024 = vrot.slane %v1992, 4
        %v2025 = vrot.slane %v1993, 4
        %v2026 = vrot.slane %v1994, 4
        %v2027 = vrot.slane %v1995, 4
        %v2028 = vrot.slane %v1996, 4
        %v2029 = vrot.slane %v1997, 4
        %v2030 = vrot.slane %v1998, 4
        %v2031 = vrot.slane %v1999, 4
        %v2032 = vrot.slane %v2000, 4
        %v2033 = vrot.slane %v2001, 4
        %v2034 = vrot.slane %v2002, 4
        %v2035 = vrot.slane %v2003, 4
        %v2036 = vrot.slane %v2004, 4
        %v2037 = vrot.slane %v2005, 4
        %v2038 = vrot.slane %v2006, 4
        %v2055 = vadd.f32 %v1933, %v2023
        %v2056 = vadd.f32 %v1934, %v2024
        %v2057 = vadd.f32 %v1935, %v2025
        %v2058 = vadd.f32 %v1936, %v2026
        %v2059 = vadd.f32 %v1937, %v2027
        %v2060 = vadd.f32 %v1938, %v2028
        %v2061 = vadd.f32 %v1939, %v2029
        %v2062 = vadd.f32 %v1940, %v2030
        %v2063 = vadd.f32 %v1941, %v2031
        %v2064 = vadd.f32 %v1942, %v2032
        %v2065 = vadd.f32 %v1943, %v2033
        %v2066 = vadd.f32 %v1944, %v2034
        %v2067 = vadd.f32 %v1945, %v2035
        %v2068 = vadd.f32 %v1946, %v2036
        %v2069 = vadd.f32 %v1947, %v2037
        %v2070 = vadd.f32 %v1948, %v2038
        %v2071 = vmul.f32 %v1438, 1.8
        %v2072 = vmul.f32 %v1592, 1.8
        %v2073 = vmul.f32 %v2071, %v1955
        %v2074 = vmul.f32 %v2072, %v1956
        %v2075 = vmul.f32 %v1833, 0.8
        %v2076 = vmul.f32 %v1834, 0.8
        %v2077 = vsub.f32 %v2073, %v2075
        %v2078 = vsub.f32 %v2074, %v2076
        %v2081 = vperm.slane %v2077, 0
        %v2082 = vperm.slane %v2077, 1
        %v2083 = vperm.slane %v2077, 2
        %v2084 = vperm.slane %v2077, 3
        %v2085 = vperm.slane %v2077, 4
        %v2086 = vperm.slane %v2077, 5
        %v2087 = vperm.slane %v2077, 6
        %v2088 = vperm.slane %v2077, 7
        %v2089 = vperm.slane %v2078, 0
        %v2090 = vperm.slane %v2078, 1
        %v2091 = vperm.slane %v2078, 2
        %v2092 = vperm.slane %v2078, 3
        %v2093 = vperm.slane %v2078, 4
        %v2094 = vperm.slane %v2078, 5
        %v2095 = vperm.slane %v2078, 6
        %v2096 = vperm.slane %v2078, 7
        %v2113 = vmul.f32 %v1071, %v2081
        %v2114 = vmul.f32 %v1085, %v2082
        %v2115 = vmul.f32 %v1099, %v2083
        %v2116 = vmul.f32 %v1113, %v2084
        %v2117 = vmul.f32 %v1127, %v2085
        %v2118 = vmul.f32 %v1141, %v2086
        %v2119 = vmul.f32 %v1155, %v2087
        %v2120 = vmul.f32 %v1169, %v2088
        %v2121 = vmul.f32 %v1183, %v2089
        %v2122 = vmul.f32 %v1197, %v2090
        %v2123 = vmul.f32 %v1211, %v2091
        %v2124 = vmul.f32 %v1225, %v2092
        %v2125 = vmul.f32 %v1239, %v2093
        %v2126 = vmul.f32 %v1253, %v2094
        %v2127 = vmul.f32 %v1267, %v2095
        %v2128 = vmul.f32 %v1281, %v2096
        %v2145 = vrot.slane %v2113, 5
        %v2146 = vrot.slane %v2114, 5
        %v2147 = vrot.slane %v2115, 5
        %v2148 = vrot.slane %v2116, 5
        %v2149 = vrot.slane %v2117, 5
        %v2150 = vrot.slane %v2118, 5
        %v2151 = vrot.slane %v2119, 5
        %v2152 = vrot.slane %v2120, 5
        %v2153 = vrot.slane %v2121, 5
        %v2154 = vrot.slane %v2122, 5
        %v2155 = vrot.slane %v2123, 5
        %v2156 = vrot.slane %v2124, 5
        %v2157 = vrot.slane %v2125, 5
        %v2158 = vrot.slane %v2126, 5
        %v2159 = vrot.slane %v2127, 5
        %v2160 = vrot.slane %v2128, 5
        %v2177 = vadd.f32 %v2055, %v2145
        %v2178 = vadd.f32 %v2056, %v2146
        %v2179 = vadd.f32 %v2057, %v2147
        %v2180 = vadd.f32 %v2058, %v2148
        %v2181 = vadd.f32 %v2059, %v2149
        %v2182 = vadd.f32 %v2060, %v2150
        %v2183 = vadd.f32 %v2061, %v2151
        %v2184 = vadd.f32 %v2062, %v2152
        %v2185 = vadd.f32 %v2063, %v2153
        %v2186 = vadd.f32 %v2064, %v2154
        %v2187 = vadd.f32 %v2065, %v2155
        %v2188 = vadd.f32 %v2066, %v2156
        %v2189 = vadd.f32 %v2067, %v2157
        %v2190 = vadd.f32 %v2068, %v2158
        %v2191 = vadd.f32 %v2069, %v2159
        %v2192 = vadd.f32 %v2070, %v2160
        %v2193 = vmul.f32 %v1438, 1.8333334
        %v2194 = vmul.f32 %v1592, 1.8333334
        %v2195 = vmul.f32 %v2193, %v2077
        %v2196 = vmul.f32 %v2194, %v2078
        %v2197 = vmul.f32 %v1955, 0.8333333
        %v2198 = vmul.f32 %v1956, 0.8333333
        %v2199 = vsub.f32 %v2195, %v2197
        %v2200 = vsub.f32 %v2196, %v2198
        %v2203 = vperm.slane %v2199, 0
        %v2204 = vperm.slane %v2199, 1
        %v2205 = vperm.slane %v2199, 2
        %v2206 = vperm.slane %v2199, 3
        %v2207 = vperm.slane %v2199, 4
        %v2208 = vperm.slane %v2199, 5
        %v2209 = vperm.slane %v2199, 6
        %v2210 = vperm.slane %v2199, 7
        %v2211 = vperm.slane %v2200, 0
        %v2212 = vperm.slane %v2200, 1
        %v2213 = vperm.slane %v2200, 2
        %v2214 = vperm.slane %v2200, 3
        %v2215 = vperm.slane %v2200, 4
        %v2216 = vperm.slane %v2200, 5
        %v2217 = vperm.slane %v2200, 6
        %v2218 = vperm.slane %v2200, 7
        %v2235 = vmul.f32 %v1071, %v2203
        %v2236 = vmul.f32 %v1085, %v2204
        %v2237 = vmul.f32 %v1099, %v2205
        %v2238 = vmul.f32 %v1113, %v2206
        %v2239 = vmul.f32 %v1127, %v2207
        %v2240 = vmul.f32 %v1141, %v2208
        %v2241 = vmul.f32 %v1155, %v2209
        %v2242 = vmul.f32 %v1169, %v2210
        %v2243 = vmul.f32 %v1183, %v2211
        %v2244 = vmul.f32 %v1197, %v2212
        %v2245 = vmul.f32 %v1211, %v2213
        %v2246 = vmul.f32 %v1225, %v2214
        %v2247 = vmul.f32 %v1239, %v2215
        %v2248 = vmul.f32 %v1253, %v2216
        %v2249 = vmul.f32 %v1267, %v2217
        %v2250 = vmul.f32 %v1281, %v2218
        %v2267 = vrot.slane %v2235, 6
        %v2268 = vrot.slane %v2236, 6
        %v2269 = vrot.slane %v2237, 6
        %v2270 = vrot.slane %v2238, 6
        %v2271 = vrot.slane %v2239, 6
        %v2272 = vrot.slane %v2240, 6
        %v2273 = vrot.slane %v2241, 6
        %v2274 = vrot.slane %v2242, 6
        %v2275 = vrot.slane %v2243, 6
        %v2276 = vrot.slane %v2244, 6
        %v2277 = vrot.slane %v2245, 6
        %v2278 = vrot.slane %v2246, 6
        %v2279 = vrot.slane %v2247, 6
        %v2280 = vrot.slane %v2248, 6
        %v2281 = vrot.slane %v2249, 6
        %v2282 = vrot.slane %v2250, 6
        %v2299 = vadd.f32 %v2177, %v2267
        %v2300 = vadd.f32 %v2178, %v2268
        %v2301 = vadd.f32 %v2179, %v2269
        %v2302 = vadd.f32 %v2180, %v2270
        %v2303 = vadd.f32 %v2181, %v2271
        %v2304 = vadd.f32 %v2182, %v2272
        %v2305 = vadd.f32 %v2183, %v2273
        %v2306 = vadd.f32 %v2184, %v2274
        %v2307 = vadd.f32 %v2185, %v2275
        %v2308 = vadd.f32 %v2186, %v2276
        %v2309 = vadd.f32 %v2187, %v2277
        %v2310 = vadd.f32 %v2188, %v2278
        %v2311 = vadd.f32 %v2189, %v2279
        %v2312 = vadd.f32 %v2190, %v2280
        %v2313 = vadd.f32 %v2191, %v2281
        %v2314 = vadd.f32 %v2192, %v2282
        %v2315 = vmul.f32 %v1438, 1.8571428
        %v2316 = vmul.f32 %v1592, 1.8571428
        %v2317 = vmul.f32 %v2315, %v2199
        %v2318 = vmul.f32 %v2316, %v2200
        %v2319 = vmul.f32 %v2077, 0.85714287
        %v2320 = vmul.f32 %v2078, 0.85714287
        %v2321 = vsub.f32 %v2317, %v2319
        %v2322 = vsub.f32 %v2318, %v2320
        %v2325 = vperm.slane %v2321, 0
        %v2326 = vperm.slane %v2321, 1
        %v2327 = vperm.slane %v2321, 2
        %v2328 = vperm.slane %v2321, 3
        %v2329 = vperm.slane %v2321, 4
        %v2330 = vperm.slane %v2321, 5
        %v2331 = vperm.slane %v2321, 6
        %v2332 = vperm.slane %v2321, 7
        %v2333 = vperm.slane %v2322, 0
        %v2334 = vperm.slane %v2322, 1
        %v2335 = vperm.slane %v2322, 2
        %v2336 = vperm.slane %v2322, 3
        %v2337 = vperm.slane %v2322, 4
        %v2338 = vperm.slane %v2322, 5
        %v2339 = vperm.slane %v2322, 6
        %v2340 = vperm.slane %v2322, 7
        %v2357 = vmul.f32 %v1071, %v2325
        %v2358 = vmul.f32 %v1085, %v2326
        %v2359 = vmul.f32 %v1099, %v2327
        %v2360 = vmul.f32 %v1113, %v2328
        %v2361 = vmul.f32 %v1127, %v2329
        %v2362 = vmul.f32 %v1141, %v2330
        %v2363 = vmul.f32 %v1155, %v2331
        %v2364 = vmul.f32 %v1169, %v2332
        %v2365 = vmul.f32 %v1183, %v2333
        %v2366 = vmul.f32 %v1197, %v2334
        %v2367 = vmul.f32 %v1211, %v2335
        %v2368 = vmul.f32 %v1225, %v2336
        %v2369 = vmul.f32 %v1239, %v2337
        %v2370 = vmul.f32 %v1253, %v2338
        %v2371 = vmul.f32 %v1267, %v2339
        %v2372 = vmul.f32 %v1281, %v2340
        %v2389 = vrot.slane %v2357, 7
        %v2390 = vrot.slane %v2358, 7
        %v2391 = vrot.slane %v2359, 7
        %v2392 = vrot.slane %v2360, 7
        %v2393 = vrot.slane %v2361, 7
        %v2394 = vrot.slane %v2362, 7
        %v2395 = vrot.slane %v2363, 7
        %v2396 = vrot.slane %v2364, 7
        %v2397 = vrot.slane %v2365, 7
        %v2398 = vrot.slane %v2366, 7
        %v2399 = vrot.slane %v2367, 7
        %v2400 = vrot.slane %v2368, 7
        %v2401 = vrot.slane %v2369, 7
        %v2402 = vrot.slane %v2370, 7
        %v2403 = vrot.slane %v2371, 7
        %v2404 = vrot.slane %v2372, 7
        %v2421 = vadd.f32 %v2299, %v2389
        %v2422 = vadd.f32 %v2300, %v2390
        %v2423 = vadd.f32 %v2301, %v2391
        %v2424 = vadd.f32 %v2302, %v2392
        %v2425 = vadd.f32 %v2303, %v2393
        %v2426 = vadd.f32 %v2304, %v2394
        %v2427 = vadd.f32 %v2305, %v2395
        %v2428 = vadd.f32 %v2306, %v2396
        %v2429 = vadd.f32 %v2307, %v2397
        %v2430 = vadd.f32 %v2308, %v2398
        %v2431 = vadd.f32 %v2309, %v2399
        %v2432 = vadd.f32 %v2310, %v2400
        %v2433 = vadd.f32 %v2311, %v2401
        %v2434 = vadd.f32 %v2312, %v2402
        %v2435 = vadd.f32 %v2313, %v2403
        %v2436 = vadd.f32 %v2314, %v2404
        %v2437 = vmul.f32 %v1438, 1.875
        %v2438 = vmul.f32 %v1592, 1.875
        %v2439 = vmul.f32 %v2437, %v2321
        %v2440 = vmul.f32 %v2438, %v2322
        %v2441 = vmul.f32 %v2199, 0.875
        %v2442 = vmul.f32 %v2200, 0.875
        %v2443 = vsub.f32 %v2439, %v2441
        %v2444 = vsub.f32 %v2440, %v2442
        %v2447 = vperm.slane %v2443, 0
        %v2448 = vperm.slane %v2443, 1
        %v2449 = vperm.slane %v2443, 2
        %v2450 = vperm.slane %v2443, 3
        %v2451 = vperm.slane %v2443, 4
        %v2452 = vperm.slane %v2443, 5
        %v2453 = vperm.slane %v2443, 6
        %v2454 = vperm.slane %v2443, 7
        %v2455 = vperm.slane %v2444, 0
        %v2456 = vperm.slane %v2444, 1
        %v2457 = vperm.slane %v2444, 2
        %v2458 = vperm.slane %v2444, 3
        %v2459 = vperm.slane %v2444, 4
        %v2460 = vperm.slane %v2444, 5
        %v2461 = vperm.slane %v2444, 6
        %v2462 = vperm.slane %v2444, 7
        %v2479 = vmul.f32 %v1073, %v2447
        %v2480 = vmul.f32 %v1087, %v2448
        %v2481 = vmul.f32 %v1101, %v2449
        %v2482 = vmul.f32 %v1115, %v2450
        %v2483 = vmul.f32 %v1129, %v2451
        %v2484 = vmul.f32 %v1143, %v2452
        %v2485 = vmul.f32 %v1157, %v2453
        %v2486 = vmul.f32 %v1171, %v2454
        %v2487 = vmul.f32 %v1185, %v2455
        %v2488 = vmul.f32 %v1199, %v2456
        %v2489 = vmul.f32 %v1213, %v2457
        %v2490 = vmul.f32 %v1227, %v2458
        %v2491 = vmul.f32 %v1241, %v2459
        %v2492 = vmul.f32 %v1255, %v2460
        %v2493 = vmul.f32 %v1269, %v2461
        %v2494 = vmul.f32 %v1283, %v2462
        %v2495 = vadd.f32 %v2421, %v2479
        %v2496 = vadd.f32 %v2422, %v2480
        %v2497 = vadd.f32 %v2423, %v2481
        %v2498 = vadd.f32 %v2424, %v2482
        %v2499 = vadd.f32 %v2425, %v2483
        %v2500 = vadd.f32 %v2426, %v2484
        %v2501 = vadd.f32 %v2427, %v2485
        %v2502 = vadd.f32 %v2428, %v2486
        %v2503 = vadd.f32 %v2429, %v2487
        %v2504 = vadd.f32 %v2430, %v2488
        %v2505 = vadd.f32 %v2431, %v2489
        %v2506 = vadd.f32 %v2432, %v2490
        %v2507 = vadd.f32 %v2433, %v2491
        %v2508 = vadd.f32 %v2434, %v2492
        %v2509 = vadd.f32 %v2435, %v2493
        %v2510 = vadd.f32 %v2436, %v2494
        %v2511 = vmul.f32 %v1438, 1.8888888
        %v2512 = vmul.f32 %v1592, 1.8888888
        %v2513 = vmul.f32 %v2511, %v2443
        %v2514 = vmul.f32 %v2512, %v2444
        %v2515 = vmul.f32 %v2321, 0.8888889
        %v2516 = vmul.f32 %v2322, 0.8888889
        %v2517 = vsub.f32 %v2513, %v2515
        %v2518 = vsub.f32 %v2514, %v2516
        %v2521 = vperm.slane %v2517, 0
        %v2522 = vperm.slane %v2517, 1
        %v2523 = vperm.slane %v2517, 2
        %v2524 = vperm.slane %v2517, 3
        %v2525 = vperm.slane %v2517, 4
        %v2526 = vperm.slane %v2517, 5
        %v2527 = vperm.slane %v2517, 6
        %v2528 = vperm.slane %v2517, 7
        %v2529 = vperm.slane %v2518, 0
        %v2530 = vperm.slane %v2518, 1
        %v2531 = vperm.slane %v2518, 2
        %v2532 = vperm.slane %v2518, 3
        %v2533 = vperm.slane %v2518, 4
        %v2534 = vperm.slane %v2518, 5
        %v2535 = vperm.slane %v2518, 6
        %v2536 = vperm.slane %v2518, 7
        %v2553 = vmul.f32 %v1073, %v2521
        %v2554 = vmul.f32 %v1087, %v2522
        %v2555 = vmul.f32 %v1101, %v2523
        %v2556 = vmul.f32 %v1115, %v2524
        %v2557 = vmul.f32 %v1129, %v2525
        %v2558 = vmul.f32 %v1143, %v2526
        %v2559 = vmul.f32 %v1157, %v2527
        %v2560 = vmul.f32 %v1171, %v2528
        %v2561 = vmul.f32 %v1185, %v2529
        %v2562 = vmul.f32 %v1199, %v2530
        %v2563 = vmul.f32 %v1213, %v2531
        %v2564 = vmul.f32 %v1227, %v2532
        %v2565 = vmul.f32 %v1241, %v2533
        %v2566 = vmul.f32 %v1255, %v2534
        %v2567 = vmul.f32 %v1269, %v2535
        %v2568 = vmul.f32 %v1283, %v2536
        %v2585 = vrot.slane %v2553, 1
        %v2586 = vrot.slane %v2554, 1
        %v2587 = vrot.slane %v2555, 1
        %v2588 = vrot.slane %v2556, 1
        %v2589 = vrot.slane %v2557, 1
        %v2590 = vrot.slane %v2558, 1
        %v2591 = vrot.slane %v2559, 1
        %v2592 = vrot.slane %v2560, 1
        %v2593 = vrot.slane %v2561, 1
        %v2594 = vrot.slane %v2562, 1
        %v2595 = vrot.slane %v2563, 1
        %v2596 = vrot.slane %v2564, 1
        %v2597 = vrot.slane %v2565, 1
        %v2598 = vrot.slane %v2566, 1
        %v2599 = vrot.slane %v2567, 1
        %v2600 = vrot.slane %v2568, 1
        %v2617 = vadd.f32 %v2495, %v2585
        %v2618 = vadd.f32 %v2496, %v2586
        %v2619 = vadd.f32 %v2497, %v2587
        %v2620 = vadd.f32 %v2498, %v2588
        %v2621 = vadd.f32 %v2499, %v2589
        %v2622 = vadd.f32 %v2500, %v2590
        %v2623 = vadd.f32 %v2501, %v2591
        %v2624 = vadd.f32 %v2502, %v2592
        %v2625 = vadd.f32 %v2503, %v2593
        %v2626 = vadd.f32 %v2504, %v2594
        %v2627 = vadd.f32 %v2505, %v2595
        %v2628 = vadd.f32 %v2506, %v2596
        %v2629 = vadd.f32 %v2507, %v2597
        %v2630 = vadd.f32 %v2508, %v2598
        %v2631 = vadd.f32 %v2509, %v2599
        %v2632 = vadd.f32 %v2510, %v2600
        %v2649 = vrot.slane %v2618, 7
        %v2650 = vrot.slane %v2619, 6
        %v2651 = vrot.slane %v2620, 5
        %v2652 = vrot.slane %v2621, 4
        %v2653 = vrot.slane %v2622, 3
        %v2654 = vrot.slane %v2623, 2
        %v2655 = vrot.slane %v2624, 1
        %v2656 = vrot.slane %v2626, 7
        %v2657 = vrot.slane %v2627, 6
        %v2658 = vrot.slane %v2628, 5
        %v2659 = vrot.slane %v2629, 4
        %v2660 = vrot.slane %v2630, 3
        %v2661 = vrot.slane %v2631, 2
        %v2662 = vrot.slane %v2632, 1
        %vm2663 = vcmask 1040384
        %v2664 = vsel %vm2663, %v2617, %v2649
        %vm2665 = vcmask 1042434
        %v2666 = vsel %vm2665, %v2650, %v2651
        %vm2667 = vcmask 1041408
        %v2668 = vsel %vm2667, %v2664, %v2666
        %vm2669 = vcmask 1044484
        %v2670 = vsel %vm2669, %v2652, %v2653
        %vm2671 = vcmask 1046534
        %v2672 = vsel %vm2671, %v2654, %v2655
        %vm2673 = vcmask 1045508
        %v2674 = vsel %vm2673, %v2670, %v2672
        %vm2675 = vcmask 1043456
        %v2676 = vsel %vm2675, %v2668, %v2674
        %v2677 = vsel %vm2663, %v2625, %v2656
        %v2678 = vsel %vm2665, %v2657, %v2658
        %v2679 = vsel %vm2667, %v2677, %v2678
        %v2680 = vsel %vm2669, %v2659, %v2660
        %v2681 = vsel %vm2671, %v2661, %v2662
        %v2682 = vsel %vm2673, %v2680, %v2681
        %v2683 = vsel %vm2675, %v2679, %v2682
        %2686 = vst [vmem:[%s272] sm:$0xff] %v2676
        %2687 = vst [vmem:[%s272 + $0x8] sm:$0xff] %v2683
        %s2688 = sand.u32 %s181, 1
        %s2689 = scalar_lea.sflag [#allocation3], %s2688
        %s2690 = sand.u32 %s181, 1
        %s2691 = smul.addr %s2690, 16
        %s2692 = scalar_lea.vmem [#allocation2], %s2691
        // Predicated region
        $region49: #{tpu_custom_call.1} parent=47 // pred_check
          %p2693 = pneg %p191
        $region50: #{tpu_custom_call.1} parent=47 // pred_check_branch
          %2695 = sbr.rel (%p2693) target = $region52
        $region51: #{tpu_custom_call.1} parent=47 // pred_region
          %s2696 = smul.u32 16, %s21
          %2698 = vsyncadd %s2689, 0
          %s2699 = scalar_lea.hbm %s7, %s2696
          %s2701 = sshll.u32 %s2692, 4
          %s2702 = int_to_ptr.vmem [resolvable:$true] %s2701
          %s2703 = sshll.u32 %s2699, 4
          %s2704 = int_to_ptr.hbm [resolvable:$true] %s2703
          %2706 = dma.vmem_to_hbm [thread:$0]  %s2702, 256, %s2704, %s2689
        $region52: #{tpu_custom_call.1} parent=47 // pred_fallthru
          _
      $region48: #{tpu_custom_call.1} parent=5 // pred_fallthru
        _
      %p2707 = scmp.le.s32.totalorder 2, %s16
      // Predicated region
      $region53: #{tpu_custom_call.1} parent=5 // pred_check
        %p2708 = pneg %p2707
      $region54: #{tpu_custom_call.1} parent=5 // pred_check_branch
        %2710 = sbr.rel (%p2708) target = $region56
      $region55: #{tpu_custom_call.1} parent=5 // pred_region
        %s2711 = ssub.s32 %s16, 2
        // Predicated region
        $region57: #{tpu_custom_call.1} parent=55 // pred_check
          %p2712 = pneg %p197
        $region58: #{tpu_custom_call.1} parent=55 // pred_check_branch
          %2714 = sbr.rel (%p2712) target = $region60
        $region59: #{tpu_custom_call.1} parent=55 // pred_region
          %s2715 = sand.u32 %s182, 1
          %s2716 = scalar_lea.sflag [#allocation3], %s2715
          %s2717 = sand.u32 %s182, 1
          %s2718 = smul.addr %s2717, 16
          %s2719 = scalar_lea.vmem [#allocation2], %s2718
          %2721 = dma.done %s2716, 256
        $region60: #{tpu_custom_call.1} parent=55 // pred_fallthru
          _
      $region56: #{tpu_custom_call.1} parent=5 // pred_fallthru
        _
    $region6: #{tpu_custom_call.1} parent=1 // loop_footer
      %s20 = sadd.s32 1, %s16
    $region7: #{tpu_custom_call.1} parent=1 // loop_footer_branch
      %15 = sbr.rel target = $region3
    $region8: #{tpu_custom_call.1} parent=1 // loop_exit
      _
    %2722 = vsyncpa [#allocation3], 1
    %s2723 = scalar_lea.sflag [#allocation3], 1
    %2724 = vsyncpa %s2723, 1

</llo_original>
